<compile_context>
chip_gen: v7x
topology: tpu7x:2x2x1
jax: 0.10.0
libtpu: 0.0.40
codegen_flags: <defaults>
</compile_context>

<pallas_src>
import math

import jax
import jax.numpy as jnp
from jax.experimental import pallas as pl
from jax.experimental.pallas import tpu as pltpu

LANE = 128  # pad feature width to the 128-lane vreg boundary


# ---------------------------------------------------------------- trunk kernel (gridded)

def _make_trunk_kernel(dim, n_tanh):
    """Fused per-tile: trunk MLP (tail-folded) + rank-1 combine + boundary combine.

    misc_ref row layout (f32, [rows, LANE], zero-padded beyond the live features):
      rows [0, dim)              : rows of W0 (first linear weight)
      row   dim                  : b0
      rows [dim+1, dim+1+n_tanh) : biases of the tanh hidden linears
      row   dim+n_tanh+1         : v  = Wa @ Wb @ 1        (folded tail weights)
      row   dim+n_tanh+2         : s  = rowsum(branch MLP output)
      row   dim+n_tanh+3         : cs = c * s,  c = (ba @ Wb + bb) @ 1
    """

    def kernel(pts_ref, w_ref, misc_ref, out_ref):
        pts = pts_ref[...]                                   # [T, dim+2] f32
        misc = misc_ref[...]                                 # [R, LANE]  f32
        ze = pts[:, dim:dim + 1]                             # zeroOnBoundaryExtension
        dc = pts[:, dim + 1:dim + 2]                         # DCBoundaryExtension
        # first linear (K = dim = 2): explicit VPU multiply-adds, no MXU push
        h = misc[dim:dim + 1, :]
        for col in range(dim):
            h = h + pts[:, col:col + 1] * misc[col:col + 1, :]
        # tanh hidden linears: bf16 MXU matmuls with f32 accumulation
        for li in range(n_tanh):
            W = w_ref[li]                                    # [LANE, LANE] bf16
            b = misc[dim + 1 + li:dim + 2 + li, :]
            h = jnp.tanh(jnp.dot(h.astype(jnp.bfloat16), W,
                                 preferred_element_type=jnp.float32) + b)
        v = misc[dim + n_tanh + 1:dim + n_tanh + 2, :]
        s = misc[dim + n_tanh + 2:dim + n_tanh + 3, :]
        cs = misc[dim + n_tanh + 3:dim + n_tanh + 4, :]
        # tail-fold: rowsum(trunk) = h @ v + c  (two activation-free linears folded)
        row = jnp.sum(h * v, axis=1, keepdims=True)          # [T, 1]
        # rank-1 rewrite of torch.tensordot(trunk, tile(s,(P,1)), 1) == row (outer) s
        out_ref[...] = (row * s + cs) * ze + dc              # lane-dense [T, LANE] store

    return kernel


def _mlp_jnp(h, params, n_tanh):
    for li, (W, b) in enumerate(params):
        h = h @ W + b
        if 1 <= li <= n_tanh:
            h = jnp.tanh(h)
    return h


def _n_point_tiles(P):
    # v7x has 2 TensorCores per chip -> keep >= 2 grid tiles so the "parallel" grid
    # axis can shard across them; v5e/v6e are single-TC -> one tile (no grid-step
    # overhead, M = P feeds the MXU with longer push sequences).
    try:
        kind = jax.devices()[0].device_kind.lower()
    except Exception:
        kind = ""
    dual_tc = ("v7" in kind) or ("7x" in kind)
    if dual_tc and P % 16 == 0:
        return 2
    return 1


def deeponet_pallas(domain_pts, branch_in, zero_ext, dc_ext,
                    trunk_params, branch_params,
                    n_layers_trunk, n_layers_branch, nmax):
    P, dim = domain_pts.shape
    n_tanh = n_layers_trunk
    assert len(trunk_params) == n_tanh + 3   # in, n_tanh*(lin+tanh), trailing lin, out
    hidden = trunk_params[0][0].shape[1]

    # ---- branch MLP (independent of domainPoints, tiny) -> plain XLA, no extra launch
    s_vec = jnp.sum(_mlp_jnp(branch_in, branch_params, n_layers_branch), axis=0)  # [nmax]

    # ---- tail-fold of the two activation-free trunk linears into (v, c)
    Wa, ba = trunk_params[n_tanh + 1]
    Wb, bb = trunk_params[n_tanh + 2]
    ones = jnp.ones((Wb.shape[1], 1), jnp.float32)
    v_vec = (Wa @ (Wb @ ones))[:, 0]                         # [hidden]
    c = ((ba @ Wb + bb) @ ones)[0, 0]                        # scalar
    cs_vec = c * s_vec                                       # [nmax]

    # ---- resident operands --------------------------------------------------
    # hidden tanh weights stacked -> one [n_tanh, LANE, LANE] bf16 operand
    w_stack = jnp.stack([
        jnp.zeros((LANE, LANE), jnp.float32)
           .at[:trunk_params[1 + li][0].shape[0], :trunk_params[1 + li][0].shape[1]]
           .set(trunk_params[1 + li][0])
        for li in range(n_tanh)
    ]).astype(jnp.bfloat16)
    # first-linear weight/bias, hidden biases, v, s, cs packed into one f32 operand
    W0, b0 = trunk_params[0]
    n_rows = dim + n_tanh + 4
    rows_p = ((n_rows + 7) // 8) * 8
    misc = jnp.zeros((rows_p, LANE), jnp.float32)
    misc = misc.at[:dim, :hidden].set(W0)
    misc = misc.at[dim, :hidden].set(b0[0])
    for li in range(n_tanh):
        bh = trunk_params[1 + li][1]
        misc = misc.at[dim + 1 + li, :bh.shape[1]].set(bh[0])
    misc = misc.at[dim + n_tanh + 1, :hidden].set(v_vec)
    misc = misc.at[dim + n_tanh + 2, :nmax].set(s_vec)
    misc = misc.at[dim + n_tanh + 3, :nmax].set(cs_vec)

    # ---- point-dependent inputs coalesced into ONE tiled array (1 DMA per step)
    packed = jnp.concatenate([domain_pts, zero_ext, dc_ext], axis=1).astype(jnp.float32)

    # ---- grid / tiling -------------------------------------------------------
    n_tiles = _n_point_tiles(P)
    # TODO(synk): pad/mask a ragged last tile before productionizing general P.
    assert P % (8 * n_tiles) == 0
    tile_p = P // n_tiles

    tiled = lambda i: (i, 0)
    resident2 = lambda i: (0, 0)
    resident3 = lambda i: (0, 0, 0)

    kernel = _make_trunk_kernel(dim, n_tanh)

    out_padded = pl.pallas_call(
        kernel,
        out_shape=jax.ShapeDtypeStruct((P, LANE), jnp.float32),
        grid_spec=pltpu.PrefetchScalarGridSpec(
            num_scalar_prefetch=0,
            grid=(n_tiles,),
            in_specs=[
                pl.BlockSpec((tile_p, dim + 2), tiled),
                pl.BlockSpec((n_tanh, LANE, LANE), resident3),
                pl.BlockSpec((rows_p, LANE), resident2),
            ],
            out_specs=pl.BlockSpec((tile_p, LANE), tiled),
        ),
        compiler_params=pltpu.CompilerParams(
            dimension_semantics=("parallel",),      # shards P across v7x's 2 TCs
            vmem_limit_bytes=32 * 1024 * 1024),     # explicit, safe on all generations
    )(packed, w_stack, misc)

    # NOTE: padded columns >= nmax carry the broadcast dc term (NOT zero) — slice
    # before any downstream lane reduction.
    return out_padded[:, :nmax]


# ------------------------------------------------------------------- domain / glue (JAX)

class UnitDisk2D:
    """Star-shaped 2-D domain: unit disk.  dim=2, radiusDomainFunciton(angles)=1."""
    dim = 2

    def radiusDomainFunciton(self, angles):
        return jnp.ones_like(angles)

    def getSphericalCoordinates(self, pts):
        r = jnp.sqrt(jnp.sum(pts * pts, axis=1))
        theta = jnp.arctan2(pts[:, 1], pts[:, 0])
        return r, theta

    def getCartesianCoordinates(self, r, angles):
        return jnp.stack([r * jnp.cos(angles), r * jnp.sin(angles)], axis=1)

    def generateSphericalRandomPointsOnBoundary(self, n, key):
        theta = jax.random.uniform(key, (n,), minval=0.0, maxval=2.0 * math.pi)
        return self.getCartesianCoordinates(jnp.ones_like(theta), theta)


def linear_radial(t):
    return 1.0 - t   # 1 at the center, 0 on the boundary


def boundary_function(pts):
    return (jnp.sin(pts[:, 0:1]) * jnp.cos(pts[:, 1:2])).astype(jnp.float32)


def zero_on_boundary_extension(domain, pts):
    r, theta = domain.getSphericalCoordinates(pts)
    R = domain.radiusDomainFunciton(theta)
    return linear_radial(r / R).reshape(-1, 1)


def dc_boundary_extension(domain, pts, bfun):
    # TODO(synk): the original DCBoundaryExtension line is syntactically invalid; this is
    # the evident intent: g(boundary point) * (1 - radialDecay(r/R)), viewed as [-1, 1].
    r, theta = domain.getSphericalCoordinates(pts)
    R = domain.radiusDomainFunciton(theta)
    bnd_pts = domain.getCartesianCoordinates(R, theta)
    return (bfun(bnd_pts) * (1.0 - linear_radial(r / R)).reshape(-1, 1)).reshape(-1, 1)


# ------------------------------------------------------------------------ parameter init

def init_linear(key, fan_in, fan_out):
    k1, k2 = jax.random.split(key)
    bound = 1.0 / math.sqrt(fan_in)
    W = jax.random.uniform(k1, (fan_in, fan_out), jnp.float32, -bound, bound)
    b = jax.random.uniform(k2, (1, fan_out), jnp.float32, -bound, bound)
    return W, b


def init_mlp(key, dims):
    params = []
    for i in range(len(dims) - 1):
        key, sub = jax.random.split(key)
        params.append(init_linear(sub, dims[i], dims[i + 1]))
    return params


# ------------------------------------------------------------------ pure-JAX f32 reference

def deeponet_ref(domain_pts, branch_in, zero_ext, dc_ext,
                 trunk_params, branch_params, n_layers_trunk, n_layers_branch):
    trunk = _mlp_jnp(domain_pts, trunk_params, n_layers_trunk)     # [P, nmax]
    branch = _mlp_jnp(branch_in, branch_params, n_layers_branch)   # [nAll, nmax]
    s = jnp.sum(branch, axis=0, keepdims=True)                     # [1, nmax]
    # identical to torch.tensordot(trunk, tile(s,(P,1)), 1) whenever it type-checks
    x = jnp.sum(trunk, axis=1, keepdims=True) * s                  # [P, nmax]
    return x * zero_ext + dc_ext


# ---------------------------------------------------------------------------------- main

if __name__ == "__main__":
    # Module hyper-parameters (small, demo-scale)
    n_hidden_trunk = 32
    n_layers_trunk = 2
    n_hidden_branch = 32
    n_layers_branch = 2
    nmax = max(n_hidden_trunk, n_hidden_branch)       # 32
    nBoundaryPoints = 16
    nRandBoundaryPoints = 8
    numPoints = 256

    domain = UnitDisk2D()
    dim = domain.dim

    root = jax.random.PRNGKey(0)
    k_pts, k_bnd, k_rand, k_trunk, k_branch = jax.random.split(root, 5)

    # Interior domain points (inside the unit disk)
    kr, kt = jax.random.split(k_pts)
    rr = jnp.sqrt(jax.random.uniform(kr, (numPoints,)))
    tt = jax.random.uniform(kt, (numPoints,), minval=0.0, maxval=2.0 * math.pi)
    domainPoints = domain.getCartesianCoordinates(rr, tt).astype(jnp.float32)   # [256, 2]

    # boundaryPoints (fixed at __init__) + random boundary points (per forward)
    boundaryPoints = domain.generateSphericalRandomPointsOnBoundary(nBoundaryPoints, k_bnd)
    randPoints = domain.generateSphericalRandomPointsOnBoundary(nRandBoundaryPoints, k_rand)
    allPoints = jnp.concatenate([boundaryPoints, randPoints], axis=0)            # [24, 2]
    boundaryValues = boundary_function(allPoints)                                # [24, 1]
    branch_in = jnp.concatenate([allPoints, boundaryValues], axis=1).astype(jnp.float32)

    # Boundary-extension terms (host-side geometry glue)
    zero_ext = zero_on_boundary_extension(domain, domainPoints).astype(jnp.float32)
    dc_ext = dc_boundary_extension(domain, domainPoints, boundary_function).astype(jnp.float32)

    # Deterministic parameter init (nn.Linear-style uniform)
    trunk_dims = ([dim, n_hidden_trunk] + [n_hidden_trunk] * n_layers_trunk
                  + [n_hidden_trunk, nmax])
    branch_dims = ([dim + 1, n_hidden_branch] + [n_hidden_branch] * n_layers_branch
                   + [n_hidden_branch, nmax])
    trunk_params = init_mlp(k_trunk, trunk_dims)      # 5 linears
    branch_params = init_mlp(k_branch, branch_dims)   # 5 linears

    fwd = jax.jit(deeponet_pallas, static_argnums=(6, 7, 8))
    out = fwd(domainPoints, branch_in, zero_ext, dc_ext,
              trunk_params, branch_params,
              n_layers_trunk, n_layers_branch, nmax)
    out = jax.block_until_ready(out)

    ref = deeponet_ref(domainPoints, branch_in, zero_ext, dc_ext,
                       trunk_params, branch_params,
                       n_layers_trunk, n_layers_branch)

    assert out.shape == (numPoints, nmax)
    err = float(jnp.max(jnp.abs(out - ref)))
    scale = float(jnp.max(jnp.abs(ref))) + 1e-6
    # bf16 MXU path (2 hidden matmuls) vs f32 reference: check relative to output scale
    assert err <= 5e-2 * scale + 5e-2, f"mismatch vs reference: err={err}, scale={scale}"

    print("KERNEL_OK")
</pallas_src>

<mosaic_0001>
module attributes {stable_mosaic.version = 11 : i64} {
  func.func @kernel(%arg0: i32, %arg1: memref<256x4xf32, #tpu.memory_space<vmem>>, %arg2: memref<2x128x128xbf16, #tpu.memory_space<vmem>>, %arg3: memref<8x128xf32, #tpu.memory_space<vmem>>, %arg4: memref<256x128xf32, #tpu.memory_space<vmem>>) attributes {dimension_semantics = [#tpu.dimension_semantics<parallel>], iteration_bounds = array<i64: 1>, scalar_prefetch = 0 : i64, scratch_operands = 0 : i64, tpu.core_type = #tpu.core_type<tc>, window_params = [{transform_indices = @transform_0, window_bounds = array<i64: 256, 4>}, {pipeline_mode = #tpu.pipeline_mode<synchronous>, transform_indices = @transform_1, window_bounds = array<i64: 2, 128, 128>}, {pipeline_mode = #tpu.pipeline_mode<synchronous>, transform_indices = @transform_2, window_bounds = array<i64: 8, 128>}, {transform_indices = @transform_3, window_bounds = array<i64: 256, 128>}]} {
    %c0 = arith.constant 0 : index
    %c0_0 = arith.constant 0 : index
    %0 = vector.load %arg1[%c0, %c0_0] : memref<256x4xf32, #tpu.memory_space<vmem>>, vector<256x4xf32>
    %c0_1 = arith.constant 0 : index
    %c0_2 = arith.constant 0 : index
    %1 = vector.load %arg3[%c0_1, %c0_2] : memref<8x128xf32, #tpu.memory_space<vmem>>, vector<8x128xf32>
    %2 = vector.extract_strided_slice %0 {offsets = [0, 2], sizes = [256, 1], strides = [1, 1]} : vector<256x4xf32> to vector<256x1xf32>
    %3 = vector.extract_strided_slice %0 {offsets = [0, 3], sizes = [256, 1], strides = [1, 1]} : vector<256x4xf32> to vector<256x1xf32>
    %4 = vector.extract_strided_slice %1 {offsets = [2, 0], sizes = [1, 128], strides = [1, 1]} : vector<8x128xf32> to vector<1x128xf32>
    %5 = vector.extract_strided_slice %0 {offsets = [0, 0], sizes = [256, 1], strides = [1, 1]} : vector<256x4xf32> to vector<256x1xf32>
    %6 = vector.extract_strided_slice %1 {offsets = [0, 0], sizes = [1, 128], strides = [1, 1]} : vector<8x128xf32> to vector<1x128xf32>
    %7 = vector.broadcast %5 : vector<256x1xf32> to vector<256x128xf32>
    %8 = vector.broadcast %6 : vector<1x128xf32> to vector<256x128xf32>
    %9 = arith.mulf %7, %8 : vector<256x128xf32>
    %10 = vector.broadcast %4 : vector<1x128xf32> to vector<256x128xf32>
    %11 = arith.addf %10, %9 : vector<256x128xf32>
    %12 = vector.extract_strided_slice %0 {offsets = [0, 1], sizes = [256, 1], strides = [1, 1]} : vector<256x4xf32> to vector<256x1xf32>
    %13 = vector.extract_strided_slice %1 {offsets = [1, 0], sizes = [1, 128], strides = [1, 1]} : vector<8x128xf32> to vector<1x128xf32>
    %14 = vector.broadcast %12 : vector<256x1xf32> to vector<256x128xf32>
    %15 = vector.broadcast %13 : vector<1x128xf32> to vector<256x128xf32>
    %16 = arith.mulf %14, %15 : vector<256x128xf32>
    %17 = arith.addf %11, %16 : vector<256x128xf32>
    %c0_3 = arith.constant 0 : index
    %c0_4 = arith.constant 0 : index
    %c0_5 = arith.constant 0 : index
    %18 = vector.load %arg2[%c0_3, %c0_4, %c0_5] : memref<2x128x128xbf16, #tpu.memory_space<vmem>>, vector<1x128x128xbf16>
    %19 = vector.shape_cast %18 : vector<1x128x128xbf16> to vector<128x128xbf16>
    %20 = vector.extract_strided_slice %1 {offsets = [3, 0], sizes = [1, 128], strides = [1, 1]} : vector<8x128xf32> to vector<1x128xf32>
    %21 = arith.truncf %17 : vector<256x128xf32> to vector<256x128xbf16>
    %cst = arith.constant dense<0.000000e+00> : vector<256x128xf32>
    %22 = tpu.matmul %21, %19, %cst {dimension_numbers = #tpu.dot_dimension_numbers<[1], [0], [0], [1], [0, 0, 1, 1], [], []>} : vector<256x128xbf16>, vector<128x128xbf16>, vector<256x128xf32> -> vector<256x128xf32>
    %23 = vector.broadcast %20 : vector<1x128xf32> to vector<256x128xf32>
    %24 = arith.addf %22, %23 : vector<256x128xf32>
    %25 = math.tanh %24 : vector<256x128xf32>
    %c1 = arith.constant 1 : index
    %c0_6 = arith.constant 0 : index
    %c0_7 = arith.constant 0 : index
    %26 = vector.load %arg2[%c1, %c0_6, %c0_7] : memref<2x128x128xbf16, #tpu.memory_space<vmem>>, vector<1x128x128xbf16>
    %27 = vector.shape_cast %26 : vector<1x128x128xbf16> to vector<128x128xbf16>
    %28 = vector.extract_strided_slice %1 {offsets = [4, 0], sizes = [1, 128], strides = [1, 1]} : vector<8x128xf32> to vector<1x128xf32>
    %29 = arith.truncf %25 : vector<256x128xf32> to vector<256x128xbf16>
    %cst_8 = arith.constant dense<0.000000e+00> : vector<256x128xf32>
    %30 = tpu.matmul %29, %27, %cst_8 {dimension_numbers = #tpu.dot_dimension_numbers<[1], [0], [0], [1], [0, 0, 1, 1], [], []>} : vector<256x128xbf16>, vector<128x128xbf16>, vector<256x128xf32> -> vector<256x128xf32>
    %31 = vector.broadcast %28 : vector<1x128xf32> to vector<256x128xf32>
    %32 = arith.addf %30, %31 : vector<256x128xf32>
    %33 = math.tanh %32 : vector<256x128xf32>
    %34 = vector.extract_strided_slice %1 {offsets = [5, 0], sizes = [1, 128], strides = [1, 1]} : vector<8x128xf32> to vector<1x128xf32>
    %35 = vector.extract_strided_slice %1 {offsets = [6, 0], sizes = [1, 128], strides = [1, 1]} : vector<8x128xf32> to vector<1x128xf32>
    %36 = vector.extract_strided_slice %1 {offsets = [7, 0], sizes = [1, 128], strides = [1, 1]} : vector<8x128xf32> to vector<1x128xf32>
    %37 = vector.broadcast %34 : vector<1x128xf32> to vector<256x128xf32>
    %38 = arith.mulf %33, %37 : vector<256x128xf32>
    %cst_9 = arith.constant dense<0.000000e+00> : vector<256xf32>
    %39 = vector.multi_reduction <add>, %38, %cst_9 [1] : vector<256x128xf32> to vector<256xf32>
    %40 = vector.shape_cast %39 : vector<256xf32> to vector<256x1xf32>
    %41 = vector.broadcast %40 : vector<256x1xf32> to vector<256x128xf32>
    %42 = vector.broadcast %35 : vector<1x128xf32> to vector<256x128xf32>
    %43 = arith.mulf %41, %42 : vector<256x128xf32>
    %44 = vector.broadcast %36 : vector<1x128xf32> to vector<256x128xf32>
    %45 = arith.addf %43, %44 : vector<256x128xf32>
    %46 = vector.broadcast %2 : vector<256x1xf32> to vector<256x128xf32>
    %47 = arith.mulf %45, %46 : vector<256x128xf32>
    %48 = vector.broadcast %3 : vector<256x1xf32> to vector<256x128xf32>
    %49 = arith.addf %47, %48 : vector<256x128xf32>
    %c0_10 = arith.constant 0 : index
    %c0_11 = arith.constant 0 : index
    %50 = vector.load %arg4[%c0_10, %c0_11] : memref<256x128xf32, #tpu.memory_space<vmem>>, vector<256x128xf32>
    tpu.vector_store %arg4[%c0_10, %c0_11], %49 {strides = array<i32>} : memref<256x128xf32, #tpu.memory_space<vmem>>, vector<256x128xf32>,
    return
  }
  func.func @transform_0(%arg0: i32) -> (i32, i32) {
    %c0_i32 = arith.constant 0 : i32
    %c0_i32_0 = arith.constant 0 : i32
    return %arg0, %c0_i32 : i32, i32
  }
  func.func @transform_1(%arg0: i32) -> (i32, i32, i32) {
    %c0_i32 = arith.constant 0 : i32
    %c0_i32_0 = arith.constant 0 : i32
    %c0_i32_1 = arith.constant 0 : i32
    %c0_i32_2 = arith.constant 0 : i32
    return %c0_i32, %c0_i32_0, %c0_i32_1 : i32, i32, i32
  }
  func.func @transform_2(%arg0: i32) -> (i32, i32) {
    %c0_i32 = arith.constant 0 : i32
    %c0_i32_0 = arith.constant 0 : i32
    %c0_i32_1 = arith.constant 0 : i32
    return %c0_i32, %c0_i32_0 : i32, i32
  }
  func.func @transform_3(%arg0: i32) -> (i32, i32) {
    %c0_i32 = arith.constant 0 : i32
    %c0_i32_0 = arith.constant 0 : i32
    return %arg0, %c0_i32 : i32, i32
  }
}

</mosaic_0001>

<llo_original>
// kernel: deeponet_pallas.1
$region0: #{deeponet_pallas.1}
  #allocation0 [shape = 'u32[]', space=smem, size = 0x4, offset = 0x4, fixed_abs, tag = 'smem constant byte address 0x4 - core index']
  #allocation1 [shape = 'u32[144,128]{1,0:T(1,128)}', space=vmem, size = 0x12000, scoped, tag = 'internal scratch']
  %s0 = inlined_call_operand.vmem [shape: f32[256,4], index: 0, kind: input, shape index: {}]
  %s1 = inlined_call_operand.vmem [shape: bf16[2,128,128], index: 1, kind: input, shape index: {}]
  %s2 = inlined_call_operand.vmem [shape: f32[8,128], index: 2, kind: input, shape index: {}]
  %s3 = inlined_call_operand.vmem [shape: f32[256,128], index: 3, kind: output, shape index: {}]
  %s4 = sld [smem:[#allocation0]]
  $region22: #{deeponet_pallas.1} parent=0
    _
  %s6 = ssub.s32 1, %s4
  %s7 = scalar_select 0, %s6, %s4
  // Predicated region
  $region2: #{deeponet_pallas.1} parent=0 // pred_check
    _
  $region3: #{deeponet_pallas.1} parent=0 // pred_check_branch
    %9 = sbr.rel (0) target = $region5
  $region4: #{deeponet_pallas.1} parent=0 // pred_region
    _
  $region5: #{deeponet_pallas.1} parent=0 // pred_fallthru
    _
  // Predicated region
  $region6: #{deeponet_pallas.1} parent=0 // pred_check
    _
  $region7: #{deeponet_pallas.1} parent=0 // pred_check_branch
    %11 = sbr.rel (0) target = $region9
  $region8: #{deeponet_pallas.1} parent=0 // pred_region
    _
  $region9: #{deeponet_pallas.1} parent=0 // pred_fallthru
    _
  // Predicated region
  $region10: #{deeponet_pallas.1} parent=0 // pred_check
    _
  $region11: #{deeponet_pallas.1} parent=0 // pred_check_branch
    %13 = sbr.rel (0) target = $region13
  $region12: #{deeponet_pallas.1} parent=0 // pred_region
    _
  $region13: #{deeponet_pallas.1} parent=0 // pred_fallthru
    _
  %v15 = vld [vmem:[%s0] sm:$0xff]
  %v16 = vld [vmem:[%s0 + $0x8] sm:$0xff]
  %v17 = vld [vmem:[%s0 + $0x10] sm:$0xff]
  %v18 = vld [vmem:[%s0 + $0x18] sm:$0xff]
  %v19 = vld [vmem:[%s0 + $0x20] sm:$0xff]
  %v20 = vld [vmem:[%s0 + $0x28] sm:$0xff]
  %v21 = vld [vmem:[%s0 + $0x30] sm:$0xff]
  %v22 = vld [vmem:[%s0 + $0x38] sm:$0xff]
  %v23 = vld [vmem:[%s0 + $0x40] sm:$0xff]
  %v24 = vld [vmem:[%s0 + $0x48] sm:$0xff]
  %v25 = vld [vmem:[%s0 + $0x50] sm:$0xff]
  %v26 = vld [vmem:[%s0 + $0x58] sm:$0xff]
  %v27 = vld [vmem:[%s0 + $0x60] sm:$0xff]
  %v28 = vld [vmem:[%s0 + $0x68] sm:$0xff]
  %v29 = vld [vmem:[%s0 + $0x70] sm:$0xff]
  %v30 = vld [vmem:[%s0 + $0x78] sm:$0xff]
  %v31 = vld [vmem:[%s0 + $0x80] sm:$0xff]
  %v32 = vld [vmem:[%s0 + $0x88] sm:$0xff]
  %v33 = vld [vmem:[%s0 + $0x90] sm:$0xff]
  %v34 = vld [vmem:[%s0 + $0x98] sm:$0xff]
  %v35 = vld [vmem:[%s0 + $0xa0] sm:$0xff]
  %v36 = vld [vmem:[%s0 + $0xa8] sm:$0xff]
  %v37 = vld [vmem:[%s0 + $0xb0] sm:$0xff]
  %v38 = vld [vmem:[%s0 + $0xb8] sm:$0xff]
  %v39 = vld [vmem:[%s0 + $0xc0] sm:$0xff]
  %v40 = vld [vmem:[%s0 + $0xc8] sm:$0xff]
  %v41 = vld [vmem:[%s0 + $0xd0] sm:$0xff]
  %v42 = vld [vmem:[%s0 + $0xd8] sm:$0xff]
  %v43 = vld [vmem:[%s0 + $0xe0] sm:$0xff]
  %v44 = vld [vmem:[%s0 + $0xe8] sm:$0xff]
  %v45 = vld [vmem:[%s0 + $0xf0] sm:$0xff]
  %v46 = vld [vmem:[%s0 + $0xf8] sm:$0xff]
  %v47 = vld [vmem:[%s2] sm:$0xff]
  %49 = vset.pattern.permute.xlu0 0
  %50 = vperm.xlu0 %49, %v15
  %v51 = vpop.permute.xlu0 %50
  %54 = vset.pattern.permute.xlu0 0
  %55 = vperm.xlu0 %54, %v16
  %v56 = vpop.permute.xlu0 %55
  %59 = vset.pattern.permute.xlu0 0
  %60 = vperm.xlu0 %59, %v17
  %v61 = vpop.permute.xlu0 %60
  %64 = vset.pattern.permute.xlu0 0
  %65 = vperm.xlu0 %64, %v18
  %v66 = vpop.permute.xlu0 %65
  %69 = vset.pattern.permute.xlu0 0
  %70 = vperm.xlu0 %69, %v19
  %v71 = vpop.permute.xlu0 %70
  %74 = vset.pattern.permute.xlu0 0
  %75 = vperm.xlu0 %74, %v20
  %v76 = vpop.permute.xlu0 %75
  %79 = vset.pattern.permute.xlu0 0
  %80 = vperm.xlu0 %79, %v21
  %v81 = vpop.permute.xlu0 %80
  %84 = vset.pattern.permute.xlu0 0
  %85 = vperm.xlu0 %84, %v22
  %v86 = vpop.permute.xlu0 %85
  %89 = vset.pattern.permute.xlu0 0
  %90 = vperm.xlu0 %89, %v23
  %v91 = vpop.permute.xlu0 %90
  %94 = vset.pattern.permute.xlu0 0
  %95 = vperm.xlu0 %94, %v24
  %v96 = vpop.permute.xlu0 %95
  %99 = vset.pattern.permute.xlu0 0
  %100 = vperm.xlu0 %99, %v25
  %v101 = vpop.permute.xlu0 %100
  %104 = vset.pattern.permute.xlu0 0
  %105 = vperm.xlu0 %104, %v26
  %v106 = vpop.permute.xlu0 %105
  %109 = vset.pattern.permute.xlu0 0
  %110 = vperm.xlu0 %109, %v27
  %v111 = vpop.permute.xlu0 %110
  %114 = vset.pattern.permute.xlu0 0
  %115 = vperm.xlu0 %114, %v28
  %v116 = vpop.permute.xlu0 %115
  %119 = vset.pattern.permute.xlu0 0
  %120 = vperm.xlu0 %119, %v29
  %v121 = vpop.permute.xlu0 %120
  %124 = vset.pattern.permute.xlu0 0
  %125 = vperm.xlu0 %124, %v30
  %v126 = vpop.permute.xlu0 %125
  %129 = vset.pattern.permute.xlu0 0
  %130 = vperm.xlu0 %129, %v31
  %v131 = vpop.permute.xlu0 %130
  %134 = vset.pattern.permute.xlu0 0
  %135 = vperm.xlu0 %134, %v32
  %v136 = vpop.permute.xlu0 %135
  %139 = vset.pattern.permute.xlu0 0
  %140 = vperm.xlu0 %139, %v33
  %v141 = vpop.permute.xlu0 %140
  %144 = vset.pattern.permute.xlu0 0
  %145 = vperm.xlu0 %144, %v34
  %v146 = vpop.permute.xlu0 %145
  %149 = vset.pattern.permute.xlu0 0
  %150 = vperm.xlu0 %149, %v35
  %v151 = vpop.permute.xlu0 %150
  %154 = vset.pattern.permute.xlu0 0
  %155 = vperm.xlu0 %154, %v36
  %v156 = vpop.permute.xlu0 %155
  %159 = vset.pattern.permute.xlu0 0
  %160 = vperm.xlu0 %159, %v37
  %v161 = vpop.permute.xlu0 %160
  %164 = vset.pattern.permute.xlu0 0
  %165 = vperm.xlu0 %164, %v38
  %v166 = vpop.permute.xlu0 %165
  %169 = vset.pattern.permute.xlu0 0
  %170 = vperm.xlu0 %169, %v39
  %v171 = vpop.permute.xlu0 %170
  %174 = vset.pattern.permute.xlu0 0
  %175 = vperm.xlu0 %174, %v40
  %v176 = vpop.permute.xlu0 %175
  %179 = vset.pattern.permute.xlu0 0
  %180 = vperm.xlu0 %179, %v41
  %v181 = vpop.permute.xlu0 %180
  %184 = vset.pattern.permute.xlu0 0
  %185 = vperm.xlu0 %184, %v42
  %v186 = vpop.permute.xlu0 %185
  %189 = vset.pattern.permute.xlu0 0
  %190 = vperm.xlu0 %189, %v43
  %v191 = vpop.permute.xlu0 %190
  %194 = vset.pattern.permute.xlu0 0
  %195 = vperm.xlu0 %194, %v44
  %v196 = vpop.permute.xlu0 %195
  %199 = vset.pattern.permute.xlu0 0
  %200 = vperm.xlu0 %199, %v45
  %v201 = vpop.permute.xlu0 %200
  %204 = vset.pattern.permute.xlu0 0
  %205 = vperm.xlu0 %204, %v46
  %v206 = vpop.permute.xlu0 %205
  %v208 = vlaneseq
  %v209 = vshrl.u32 %v208, 7
  %v210 = vsub.s32 0, %v209
  %v211 = vrot.slane %v47, %v210
  %v212 = vmul.f32 %v51, %v211
  %v213 = vmul.f32 %v56, %v211
  %v214 = vmul.f32 %v61, %v211
  %v215 = vmul.f32 %v66, %v211
  %v216 = vmul.f32 %v71, %v211
  %v217 = vmul.f32 %v76, %v211
  %v218 = vmul.f32 %v81, %v211
  %v219 = vmul.f32 %v86, %v211
  %v220 = vmul.f32 %v91, %v211
  %v221 = vmul.f32 %v96, %v211
  %v222 = vmul.f32 %v101, %v211
  %v223 = vmul.f32 %v106, %v211
  %v224 = vmul.f32 %v111, %v211
  %v225 = vmul.f32 %v116, %v211
  %v226 = vmul.f32 %v121, %v211
  %v227 = vmul.f32 %v126, %v211
  %v228 = vmul.f32 %v131, %v211
  %v229 = vmul.f32 %v136, %v211
  %v230 = vmul.f32 %v141, %v211
  %v231 = vmul.f32 %v146, %v211
  %v232 = vmul.f32 %v151, %v211
  %v233 = vmul.f32 %v156, %v211
  %v234 = vmul.f32 %v161, %v211
  %v235 = vmul.f32 %v166, %v211
  %v236 = vmul.f32 %v171, %v211
  %v237 = vmul.f32 %v176, %v211
  %v238 = vmul.f32 %v181, %v211
  %v239 = vmul.f32 %v186, %v211
  %v240 = vmul.f32 %v191, %v211
  %v241 = vmul.f32 %v196, %v211
  %v242 = vmul.f32 %v201, %v211
  %v243 = vmul.f32 %v206, %v211
  %v244 = vlaneseq
  %v245 = vshrl.u32 %v244, 7
  %v246 = vsub.s32 2, %v245
  %v247 = vrot.slane %v47, %v246
  %v248 = vadd.f32 %v247, %v212
  %v249 = vadd.f32 %v247, %v213
  %v250 = vadd.f32 %v247, %v214
  %v251 = vadd.f32 %v247, %v215
  %v252 = vadd.f32 %v247, %v216
  %v253 = vadd.f32 %v247, %v217
  %v254 = vadd.f32 %v247, %v218
  %v255 = vadd.f32 %v247, %v219
  %v256 = vadd.f32 %v247, %v220
  %v257 = vadd.f32 %v247, %v221
  %v258 = vadd.f32 %v247, %v222
  %v259 = vadd.f32 %v247, %v223
  %v260 = vadd.f32 %v247, %v224
  %v261 = vadd.f32 %v247, %v225
  %v262 = vadd.f32 %v247, %v226
  %v263 = vadd.f32 %v247, %v227
  %v264 = vadd.f32 %v247, %v228
  %v265 = vadd.f32 %v247, %v229
  %v266 = vadd.f32 %v247, %v230
  %v267 = vadd.f32 %v247, %v231
  %v268 = vadd.f32 %v247, %v232
  %v269 = vadd.f32 %v247, %v233
  %v270 = vadd.f32 %v247, %v234
  %v271 = vadd.f32 %v247, %v235
  %v272 = vadd.f32 %v247, %v236
  %v273 = vadd.f32 %v247, %v237
  %v274 = vadd.f32 %v247, %v238
  %v275 = vadd.f32 %v247, %v239
  %v276 = vadd.f32 %v247, %v240
  %v277 = vadd.f32 %v247, %v241
  %v278 = vadd.f32 %v247, %v242
  %v279 = vadd.f32 %v247, %v243
  %280 = vset.pattern.permute.xlu0 1
  %281 = vperm.xlu0 %280, %v15
  %v282 = vpop.permute.xlu0 %281
  %284 = vset.pattern.permute.xlu0 1
  %285 = vperm.xlu0 %284, %v16
  %v286 = vpop.permute.xlu0 %285
  %288 = vset.pattern.permute.xlu0 1
  %289 = vperm.xlu0 %288, %v17
  %v290 = vpop.permute.xlu0 %289
  %292 = vset.pattern.permute.xlu0 1
  %293 = vperm.xlu0 %292, %v18
  %v294 = vpop.permute.xlu0 %293
  %296 = vset.pattern.permute.xlu0 1
  %297 = vperm.xlu0 %296, %v19
  %v298 = vpop.permute.xlu0 %297
  %300 = vset.pattern.permute.xlu0 1
  %301 = vperm.xlu0 %300, %v20
  %v302 = vpop.permute.xlu0 %301
  %304 = vset.pattern.permute.xlu0 1
  %305 = vperm.xlu0 %304, %v21
  %v306 = vpop.permute.xlu0 %305
  %308 = vset.pattern.permute.xlu0 1
  %309 = vperm.xlu0 %308, %v22
  %v310 = vpop.permute.xlu0 %309
  %312 = vset.pattern.permute.xlu0 1
  %313 = vperm.xlu0 %312, %v23
  %v314 = vpop.permute.xlu0 %313
  %316 = vset.pattern.permute.xlu0 1
  %317 = vperm.xlu0 %316, %v24
  %v318 = vpop.permute.xlu0 %317
  %320 = vset.pattern.permute.xlu0 1
  %321 = vperm.xlu0 %320, %v25
  %v322 = vpop.permute.xlu0 %321
  %324 = vset.pattern.permute.xlu0 1
  %325 = vperm.xlu0 %324, %v26
  %v326 = vpop.permute.xlu0 %325
  %328 = vset.pattern.permute.xlu0 1
  %329 = vperm.xlu0 %328, %v27
  %v330 = vpop.permute.xlu0 %329
  %332 = vset.pattern.permute.xlu0 1
  %333 = vperm.xlu0 %332, %v28
  %v334 = vpop.permute.xlu0 %333
  %336 = vset.pattern.permute.xlu0 1
  %337 = vperm.xlu0 %336, %v29
  %v338 = vpop.permute.xlu0 %337
  %340 = vset.pattern.permute.xlu0 1
  %341 = vperm.xlu0 %340, %v30
  %v342 = vpop.permute.xlu0 %341
  %344 = vset.pattern.permute.xlu0 1
  %345 = vperm.xlu0 %344, %v31
  %v346 = vpop.permute.xlu0 %345
  %348 = vset.pattern.permute.xlu0 1
  %349 = vperm.xlu0 %348, %v32
  %v350 = vpop.permute.xlu0 %349
  %352 = vset.pattern.permute.xlu0 1
  %353 = vperm.xlu0 %352, %v33
  %v354 = vpop.permute.xlu0 %353
  %356 = vset.pattern.permute.xlu0 1
  %357 = vperm.xlu0 %356, %v34
  %v358 = vpop.permute.xlu0 %357
  %360 = vset.pattern.permute.xlu0 1
  %361 = vperm.xlu0 %360, %v35
  %v362 = vpop.permute.xlu0 %361
  %364 = vset.pattern.permute.xlu0 1
  %365 = vperm.xlu0 %364, %v36
  %v366 = vpop.permute.xlu0 %365
  %368 = vset.pattern.permute.xlu0 1
  %369 = vperm.xlu0 %368, %v37
  %v370 = vpop.permute.xlu0 %369
  %372 = vset.pattern.permute.xlu0 1
  %373 = vperm.xlu0 %372, %v38
  %v374 = vpop.permute.xlu0 %373
  %376 = vset.pattern.permute.xlu0 1
  %377 = vperm.xlu0 %376, %v39
  %v378 = vpop.permute.xlu0 %377
  %380 = vset.pattern.permute.xlu0 1
  %381 = vperm.xlu0 %380, %v40
  %v382 = vpop.permute.xlu0 %381
  %384 = vset.pattern.permute.xlu0 1
  %385 = vperm.xlu0 %384, %v41
  %v386 = vpop.permute.xlu0 %385
  %388 = vset.pattern.permute.xlu0 1
  %389 = vperm.xlu0 %388, %v42
  %v390 = vpop.permute.xlu0 %389
  %392 = vset.pattern.permute.xlu0 1
  %393 = vperm.xlu0 %392, %v43
  %v394 = vpop.permute.xlu0 %393
  %396 = vset.pattern.permute.xlu0 1
  %397 = vperm.xlu0 %396, %v44
  %v398 = vpop.permute.xlu0 %397
  %400 = vset.pattern.permute.xlu0 1
  %401 = vperm.xlu0 %400, %v45
  %v402 = vpop.permute.xlu0 %401
  %404 = vset.pattern.permute.xlu0 1
  %405 = vperm.xlu0 %404, %v46
  %v406 = vpop.permute.xlu0 %405
  %v408 = vlaneseq
  %v409 = vshrl.u32 %v408, 7
  %v410 = vsub.s32 1, %v409
  %v411 = vrot.slane %v47, %v410
  %v412 = vmul.f32 %v282, %v411
  %v413 = vmul.f32 %v286, %v411
  %v414 = vmul.f32 %v290, %v411
  %v415 = vmul.f32 %v294, %v411
  %v416 = vmul.f32 %v298, %v411
  %v417 = vmul.f32 %v302, %v411
  %v418 = vmul.f32 %v306, %v411
  %v419 = vmul.f32 %v310, %v411
  %v420 = vmul.f32 %v314, %v411
  %v421 = vmul.f32 %v318, %v411
  %v422 = vmul.f32 %v322, %v411
  %v423 = vmul.f32 %v326, %v411
  %v424 = vmul.f32 %v330, %v411
  %v425 = vmul.f32 %v334, %v411
  %v426 = vmul.f32 %v338, %v411
  %v427 = vmul.f32 %v342, %v411
  %v428 = vmul.f32 %v346, %v411
  %v429 = vmul.f32 %v350, %v411
  %v430 = vmul.f32 %v354, %v411
  %v431 = vmul.f32 %v358, %v411
  %v432 = vmul.f32 %v362, %v411
  %v433 = vmul.f32 %v366, %v411
  %v434 = vmul.f32 %v370, %v411
  %v435 = vmul.f32 %v374, %v411
  %v436 = vmul.f32 %v378, %v411
  %v437 = vmul.f32 %v382, %v411
  %v438 = vmul.f32 %v386, %v411
  %v439 = vmul.f32 %v390, %v411
  %v440 = vmul.f32 %v394, %v411
  %v441 = vmul.f32 %v398, %v411
  %v442 = vmul.f32 %v402, %v411
  %v443 = vmul.f32 %v406, %v411
  %v444 = vadd.f32 %v248, %v412
  %v445 = vadd.f32 %v249, %v413
  %v446 = vadd.f32 %v250, %v414
  %v447 = vadd.f32 %v251, %v415
  %v448 = vadd.f32 %v252, %v416
  %v449 = vadd.f32 %v253, %v417
  %v450 = vadd.f32 %v254, %v418
  %v451 = vadd.f32 %v255, %v419
  %v452 = vadd.f32 %v256, %v420
  %v453 = vadd.f32 %v257, %v421
  %v454 = vadd.f32 %v258, %v422
  %v455 = vadd.f32 %v259, %v423
  %v456 = vadd.f32 %v260, %v424
  %v457 = vadd.f32 %v261, %v425
  %v458 = vadd.f32 %v262, %v426
  %v459 = vadd.f32 %v263, %v427
  %v460 = vadd.f32 %v264, %v428
  %v461 = vadd.f32 %v265, %v429
  %v462 = vadd.f32 %v266, %v430
  %v463 = vadd.f32 %v267, %v431
  %v464 = vadd.f32 %v268, %v432
  %v465 = vadd.f32 %v269, %v433
  %v466 = vadd.f32 %v270, %v434
  %v467 = vadd.f32 %v271, %v435
  %v468 = vadd.f32 %v272, %v436
  %v469 = vadd.f32 %v273, %v437
  %v470 = vadd.f32 %v274, %v438
  %v471 = vadd.f32 %v275, %v439
  %v472 = vadd.f32 %v276, %v440
  %v473 = vadd.f32 %v277, %v441
  %v474 = vadd.f32 %v278, %v442
  %v475 = vadd.f32 %v279, %v443
  %v476 = vld [vmem:[%s1] sm:$0xf]
  %v477 = vld [vmem:[%s1 + $0x4] sm:$0xf]
  %v478 = vld [vmem:[%s1 + $0x8] sm:$0xf]
  %v479 = vld [vmem:[%s1 + $0xc] sm:$0xf]
  %v480 = vld [vmem:[%s1 + $0x10] sm:$0xf]
  %v481 = vld [vmem:[%s1 + $0x14] sm:$0xf]
  %v482 = vld [vmem:[%s1 + $0x18] sm:$0xf]
  %v483 = vld [vmem:[%s1 + $0x1c] sm:$0xf]
  %v484 = vld [vmem:[%s1 + $0x20] sm:$0xf]
  %v485 = vld [vmem:[%s1 + $0x24] sm:$0xf]
  %v486 = vld [vmem:[%s1 + $0x28] sm:$0xf]
  %v487 = vld [vmem:[%s1 + $0x2c] sm:$0xf]
  %v488 = vld [vmem:[%s1 + $0x30] sm:$0xf]
  %v489 = vld [vmem:[%s1 + $0x34] sm:$0xf]
  %v490 = vld [vmem:[%s1 + $0x38] sm:$0xf]
  %v491 = vld [vmem:[%s1 + $0x3c] sm:$0xf]
  %v492 = vpack.c.bf16 %v445, %v444
  %v493 = vpack.c.bf16 %v447, %v446
  %v494 = vpack.c.bf16 %v449, %v448
  %v495 = vpack.c.bf16 %v451, %v450
  %v496 = vpack.c.bf16 %v453, %v452
  %v497 = vpack.c.bf16 %v455, %v454
  %v498 = vpack.c.bf16 %v457, %v456
  %v499 = vpack.c.bf16 %v459, %v458
  %v500 = vpack.c.bf16 %v461, %v460
  %v501 = vpack.c.bf16 %v463, %v462
  %v502 = vpack.c.bf16 %v465, %v464
  %v503 = vpack.c.bf16 %v467, %v466
  %v504 = vpack.c.bf16 %v469, %v468
  %v505 = vpack.c.bf16 %v471, %v470
  %v506 = vpack.c.bf16 %v473, %v472
  %v507 = vpack.c.bf16 %v475, %v474
  %v508 = vlaneseq
  %v509 = vshrl.u32 %v508, 7
  %v510 = vsub.s32 3, %v509
  %v511 = vrot.slane %v47, %v510
  %v528 = vunpack.c.l.b16 %v476
  %v529 = vunpack.c.l.b16 %v477
  %v530 = vunpack.c.l.b16 %v478
  %v531 = vunpack.c.l.b16 %v479
  %v532 = vunpack.c.l.b16 %v480
  %v533 = vunpack.c.l.b16 %v481
  %v534 = vunpack.c.l.b16 %v482
  %v535 = vunpack.c.l.b16 %v483
  %v536 = vunpack.c.l.b16 %v484
  %v537 = vunpack.c.l.b16 %v485
  %v538 = vunpack.c.l.b16 %v486
  %v539 = vunpack.c.l.b16 %v487
  %v540 = vunpack.c.l.b16 %v488
  %v541 = vunpack.c.l.b16 %v489
  %v542 = vunpack.c.l.b16 %v490
  %v543 = vunpack.c.l.b16 %v491
  %v544 = vpack.c.b16 %v529, %v528
  %v545 = vpack.c.b16 %v531, %v530
  %v546 = vpack.c.b16 %v533, %v532
  %v547 = vpack.c.b16 %v535, %v534
  %v548 = vpack.c.b16 %v537, %v536
  %v549 = vpack.c.b16 %v539, %v538
  %v550 = vpack.c.b16 %v541, %v540
  %v551 = vpack.c.b16 %v543, %v542
  %560 = vmatprep.subr.bf16.mxu0 0
  %561 = vmatpush1.bf16.msra.mxu0 %v544
  %562 = vmatprep.subr.bf16.mxu0 0
  %563 = vmatpush1.bf16.msra.mxu0 %v545
  %564 = vmatprep.subr.bf16.mxu0 0
  %565 = vmatpush1.bf16.msra.mxu0 %v546
  %566 = vmatprep.subr.bf16.mxu0 0
  %567 = vmatpush1.bf16.msra.mxu0 %v547
  %568 = vmatprep.subr.bf16.mxu0 0
  %569 = vmatpush1.bf16.msra.mxu0 %v548
  %570 = vmatprep.subr.bf16.mxu0 0
  %571 = vmatpush1.bf16.msra.mxu0 %v549
  %572 = vmatprep.subr.bf16.mxu0 0
  %573 = vmatpush1.bf16.msra.mxu0 %v550
  %574 = vmatprep.subr.bf16.mxu0 0
  %575 = vmatpush1.bf16.msra.mxu0 %v551
  %576 = vmatprep.subr.bf16.mxu0 0
  %577 = vmatpush1.bf16.msra.mxu0 0
  %578 = vmatprep.subr.bf16.mxu0 0
  %579 = vmatpush1.bf16.msra.mxu0 0
  %580 = vmatprep.subr.bf16.mxu0 0
  %581 = vmatpush1.bf16.msra.mxu0 0
  %582 = vmatprep.subr.bf16.mxu0 0
  %583 = vmatpush1.bf16.msra.mxu0 0
  %584 = vmatprep.subr.bf16.mxu0 0
  %585 = vmatpush1.bf16.msra.mxu0 0
  %586 = vmatprep.subr.bf16.mxu0 0
  %587 = vmatpush1.bf16.msra.mxu0 0
  %588 = vmatprep.subr.bf16.mxu0 0
  %589 = vmatpush1.bf16.msra.mxu0 0
  %590 = vmatprep.subr.bf16.mxu0 0
  %591 = vmatpush1.bf16.msra.mxu0 0
  %592 = vmatprep.mubr.bf16.mxu0 0
  %593 = vmatmul.mubr.bf16.gmra.mrb[0].mxu0 %v492
  %v594 = vpop.f32.mrb[0].mxu0
  %v595 = vadd.f32 %v511, %v594
  %v596 = vpop.f32.mrb[0].mxu0
  %v597 = vpop.f32.mrb[0].mxu0
  %v598 = vadd.f32 %v511, %v597
  %v599 = vpop.f32.mrb[0].mxu0
  %600 = vmatprep.mubr.bf16.mxu0 0
  %601 = vmatmul.mubr.bf16.gmra.mrb[0].mxu0 %v493
  %v602 = vpop.f32.mrb[0].mxu0
  %v603 = vadd.f32 %v511, %v602
  %v604 = vpop.f32.mrb[0].mxu0
  %v605 = vpop.f32.mrb[0].mxu0
  %v606 = vadd.f32 %v511, %v605
  %v607 = vpop.f32.mrb[0].mxu0
  %608 = vmatprep.mubr.bf16.mxu0 0
  %609 = vmatmul.mubr.bf16.gmra.mrb[0].mxu0 %v494
  %v610 = vpop.f32.mrb[0].mxu0
  %v611 = vadd.f32 %v511, %v610
  %v612 = vpop.f32.mrb[0].mxu0
  %v613 = vpop.f32.mrb[0].mxu0
  %v614 = vadd.f32 %v511, %v613
  %v615 = vpop.f32.mrb[0].mxu0
  %616 = vmatprep.mubr.bf16.mxu0 0
  %617 = vmatmul.mubr.bf16.gmra.mrb[0].mxu0 %v495
  %v618 = vpop.f32.mrb[0].mxu0
  %v619 = vadd.f32 %v511, %v618
  %v620 = vpop.f32.mrb[0].mxu0
  %v621 = vpop.f32.mrb[0].mxu0
  %v622 = vadd.f32 %v511, %v621
  %v623 = vpop.f32.mrb[0].mxu0
  %624 = vmatprep.mubr.bf16.mxu0 0
  %625 = vmatmul.mubr.bf16.gmra.mrb[0].mxu0 %v496
  %v626 = vpop.f32.mrb[0].mxu0
  %v627 = vadd.f32 %v511, %v626
  %v628 = vpop.f32.mrb[0].mxu0
  %v629 = vpop.f32.mrb[0].mxu0
  %v630 = vadd.f32 %v511, %v629
  %v631 = vpop.f32.mrb[0].mxu0
  %632 = vmatprep.mubr.bf16.mxu0 0
  %633 = vmatmul.mubr.bf16.gmra.mrb[0].mxu0 %v497
  %v634 = vpop.f32.mrb[0].mxu0
  %v635 = vadd.f32 %v511, %v634
  %v636 = vpop.f32.mrb[0].mxu0
  %v637 = vpop.f32.mrb[0].mxu0
  %v638 = vadd.f32 %v511, %v637
  %v639 = vpop.f32.mrb[0].mxu0
  %640 = vmatprep.mubr.bf16.mxu0 0
  %641 = vmatmul.mubr.bf16.gmra.mrb[0].mxu0 %v498
  %v642 = vpop.f32.mrb[0].mxu0
  %v643 = vadd.f32 %v511, %v642
  %v644 = vpop.f32.mrb[0].mxu0
  %v645 = vpop.f32.mrb[0].mxu0
  %v646 = vadd.f32 %v511, %v645
  %v647 = vpop.f32.mrb[0].mxu0
  %648 = vmatprep.mubr.bf16.mxu0 0
  %649 = vmatmul.mubr.bf16.gmra.mrb[0].mxu0 %v499
  %v650 = vpop.f32.mrb[0].mxu0
  %v651 = vadd.f32 %v511, %v650
  %v652 = vpop.f32.mrb[0].mxu0
  %v653 = vpop.f32.mrb[0].mxu0
  %v654 = vadd.f32 %v511, %v653
  %v655 = vpop.f32.mrb[0].mxu0
  %656 = vmatprep.mubr.bf16.mxu0 0
  %657 = vmatmul.mubr.bf16.gmra.mrb[0].mxu0 %v500
  %v658 = vpop.f32.mrb[0].mxu0
  %v659 = vadd.f32 %v511, %v658
  %v660 = vpop.f32.mrb[0].mxu0
  %v661 = vpop.f32.mrb[0].mxu0
  %v662 = vadd.f32 %v511, %v661
  %v663 = vpop.f32.mrb[0].mxu0
  %664 = vmatprep.mubr.bf16.mxu0 0
  %665 = vmatmul.mubr.bf16.gmra.mrb[0].mxu0 %v501
  %v666 = vpop.f32.mrb[0].mxu0
  %v667 = vadd.f32 %v511, %v666
  %v668 = vpop.f32.mrb[0].mxu0
  %v669 = vpop.f32.mrb[0].mxu0
  %v670 = vadd.f32 %v511, %v669
  %v671 = vpop.f32.mrb[0].mxu0
  %672 = vmatprep.mubr.bf16.mxu0 0
  %673 = vmatmul.mubr.bf16.gmra.mrb[0].mxu0 %v502
  %v674 = vpop.f32.mrb[0].mxu0
  %v675 = vadd.f32 %v511, %v674
  %v676 = vpop.f32.mrb[0].mxu0
  %v677 = vpop.f32.mrb[0].mxu0
  %v678 = vadd.f32 %v511, %v677
  %v679 = vpop.f32.mrb[0].mxu0
  %680 = vmatprep.mubr.bf16.mxu0 0
  %681 = vmatmul.mubr.bf16.gmra.mrb[0].mxu0 %v503
  %v682 = vpop.f32.mrb[0].mxu0
  %v683 = vadd.f32 %v511, %v682
  %v684 = vpop.f32.mrb[0].mxu0
  %v685 = vpop.f32.mrb[0].mxu0
  %v686 = vadd.f32 %v511, %v685
  %v687 = vpop.f32.mrb[0].mxu0
  %688 = vmatprep.mubr.bf16.mxu0 0
  %689 = vmatmul.mubr.bf16.gmra.mrb[0].mxu0 %v504
  %v690 = vpop.f32.mrb[0].mxu0
  %v691 = vadd.f32 %v511, %v690
  %v692 = vpop.f32.mrb[0].mxu0
  %v693 = vpop.f32.mrb[0].mxu0
  %v694 = vadd.f32 %v511, %v693
  %v695 = vpop.f32.mrb[0].mxu0
  %696 = vmatprep.mubr.bf16.mxu0 0
  %697 = vmatmul.mubr.bf16.gmra.mrb[0].mxu0 %v505
  %v698 = vpop.f32.mrb[0].mxu0
  %v699 = vadd.f32 %v511, %v698
  %v700 = vpop.f32.mrb[0].mxu0
  %v701 = vpop.f32.mrb[0].mxu0
  %v702 = vadd.f32 %v511, %v701
  %v703 = vpop.f32.mrb[0].mxu0
  %704 = vmatprep.mubr.bf16.mxu0 0
  %705 = vmatmul.mubr.bf16.gmra.mrb[0].mxu0 %v506
  %v706 = vpop.f32.mrb[0].mxu0
  %v707 = vadd.f32 %v511, %v706
  %v708 = vpop.f32.mrb[0].mxu0
  %v709 = vpop.f32.mrb[0].mxu0
  %v710 = vadd.f32 %v511, %v709
  %v711 = vpop.f32.mrb[0].mxu0
  %712 = vmatprep.mubr.bf16.mxu0 0
  %713 = vmatmul.mubr.bf16.gmra.mrb[0].mxu0 %v507
  %v714 = vpop.f32.mrb[0].mxu0
  %v715 = vadd.f32 %v511, %v714
  %v716 = vpop.f32.mrb[0].mxu0
  %v717 = vpop.f32.mrb[0].mxu0
  %v718 = vadd.f32 %v511, %v717
  %v719 = vpop.f32.mrb[0].mxu0
  %720 = vdwg.mxu0
  %v721 = vtanh.pop %v595
  %v722 = vtanh.pop %v598
  %v723 = vtanh.pop %v603
  %v724 = vtanh.pop %v606
  %v725 = vtanh.pop %v611
  %v726 = vtanh.pop %v614
  %v727 = vtanh.pop %v619
  %v728 = vtanh.pop %v622
  %v729 = vtanh.pop %v627
  %v730 = vtanh.pop %v630
  %v731 = vtanh.pop %v635
  %v732 = vtanh.pop %v638
  %v733 = vtanh.pop %v643
  %v734 = vtanh.pop %v646
  %v735 = vtanh.pop %v651
  %v736 = vtanh.pop %v654
  %v737 = vtanh.pop %v659
  %v738 = vtanh.pop %v662
  %v739 = vtanh.pop %v667
  %v740 = vtanh.pop %v670
  %v741 = vtanh.pop %v675
  %v742 = vtanh.pop %v678
  %v743 = vtanh.pop %v683
  %v744 = vtanh.pop %v686
  %v745 = vtanh.pop %v691
  %v746 = vtanh.pop %v694
  %v747 = vtanh.pop %v699
  %v748 = vtanh.pop %v702
  %v749 = vtanh.pop %v707
  %v750 = vtanh.pop %v710
  %v751 = vtanh.pop %v715
  %v752 = vtanh.pop %v718
  %s753 = scalar_lea.vmem %s1, 64
  %v754 = vld [vmem:[%s753] sm:$0xf]
  %v755 = vld [vmem:[%s753 + $0x4] sm:$0xf]
  %v756 = vld [vmem:[%s753 + $0x8] sm:$0xf]
  %v757 = vld [vmem:[%s753 + $0xc] sm:$0xf]
  %v758 = vld [vmem:[%s753 + $0x10] sm:$0xf]
  %v759 = vld [vmem:[%s753 + $0x14] sm:$0xf]
  %v760 = vld [vmem:[%s753 + $0x18] sm:$0xf]
  %v761 = vld [vmem:[%s753 + $0x1c] sm:$0xf]
  %v762 = vld [vmem:[%s753 + $0x20] sm:$0xf]
  %v763 = vld [vmem:[%s753 + $0x24] sm:$0xf]
  %v764 = vld [vmem:[%s753 + $0x28] sm:$0xf]
  %v765 = vld [vmem:[%s753 + $0x2c] sm:$0xf]
  %v766 = vld [vmem:[%s753 + $0x30] sm:$0xf]
  %v767 = vld [vmem:[%s753 + $0x34] sm:$0xf]
  %v768 = vld [vmem:[%s753 + $0x38] sm:$0xf]
  %v769 = vld [vmem:[%s753 + $0x3c] sm:$0xf]
  %v770 = vpack.c.bf16 %v722, %v721
  %v771 = vpack.c.bf16 %v724, %v723
  %v772 = vpack.c.bf16 %v726, %v725
  %v773 = vpack.c.bf16 %v728, %v727
  %v774 = vpack.c.bf16 %v730, %v729
  %v775 = vpack.c.bf16 %v732, %v731
  %v776 = vpack.c.bf16 %v734, %v733
  %v777 = vpack.c.bf16 %v736, %v735
  %v778 = vpack.c.bf16 %v738, %v737
  %v779 = vpack.c.bf16 %v740, %v739
  %v780 = vpack.c.bf16 %v742, %v741
  %v781 = vpack.c.bf16 %v744, %v743
  %v782 = vpack.c.bf16 %v746, %v745
  %v783 = vpack.c.bf16 %v748, %v747
  %v784 = vpack.c.bf16 %v750, %v749
  %v785 = vpack.c.bf16 %v752, %v751
  %v786 = vlaneseq
  %v787 = vshrl.u32 %v786, 7
  %v788 = vsub.s32 4, %v787
  %v789 = vrot.slane %v47, %v788
  %v806 = vunpack.c.l.b16 %v754
  %v807 = vunpack.c.l.b16 %v755
  %v808 = vunpack.c.l.b16 %v756
  %v809 = vunpack.c.l.b16 %v757
  %v810 = vunpack.c.l.b16 %v758
  %v811 = vunpack.c.l.b16 %v759
  %v812 = vunpack.c.l.b16 %v760
  %v813 = vunpack.c.l.b16 %v761
  %v814 = vunpack.c.l.b16 %v762
  %v815 = vunpack.c.l.b16 %v763
  %v816 = vunpack.c.l.b16 %v764
  %v817 = vunpack.c.l.b16 %v765
  %v818 = vunpack.c.l.b16 %v766
  %v819 = vunpack.c.l.b16 %v767
  %v820 = vunpack.c.l.b16 %v768
  %v821 = vunpack.c.l.b16 %v769
  %v822 = vpack.c.b16 %v807, %v806
  %v823 = vpack.c.b16 %v809, %v808
  %v824 = vpack.c.b16 %v811, %v810
  %v825 = vpack.c.b16 %v813, %v812
  %v826 = vpack.c.b16 %v815, %v814
  %v827 = vpack.c.b16 %v817, %v816
  %v828 = vpack.c.b16 %v819, %v818
  %v829 = vpack.c.b16 %v821, %v820
  %838 = vmatprep.subr.bf16.mxu0 0
  %839 = vmatpush1.bf16.msra.mxu0 %v822
  %840 = vmatprep.subr.bf16.mxu0 0
  %841 = vmatpush1.bf16.msra.mxu0 %v823
  %842 = vmatprep.subr.bf16.mxu0 0
  %843 = vmatpush1.bf16.msra.mxu0 %v824
  %844 = vmatprep.subr.bf16.mxu0 0
  %845 = vmatpush1.bf16.msra.mxu0 %v825
  %846 = vmatprep.subr.bf16.mxu0 0
  %847 = vmatpush1.bf16.msra.mxu0 %v826
  %848 = vmatprep.subr.bf16.mxu0 0
  %849 = vmatpush1.bf16.msra.mxu0 %v827
  %850 = vmatprep.subr.bf16.mxu0 0
  %851 = vmatpush1.bf16.msra.mxu0 %v828
  %852 = vmatprep.subr.bf16.mxu0 0
  %853 = vmatpush1.bf16.msra.mxu0 %v829
  %854 = vmatprep.subr.bf16.mxu0 0
  %855 = vmatpush1.bf16.msra.mxu0 0
  %856 = vmatprep.subr.bf16.mxu0 0
  %857 = vmatpush1.bf16.msra.mxu0 0
  %858 = vmatprep.subr.bf16.mxu0 0
  %859 = vmatpush1.bf16.msra.mxu0 0
  %860 = vmatprep.subr.bf16.mxu0 0
  %861 = vmatpush1.bf16.msra.mxu0 0
  %862 = vmatprep.subr.bf16.mxu0 0
  %863 = vmatpush1.bf16.msra.mxu0 0
  %864 = vmatprep.subr.bf16.mxu0 0
  %865 = vmatpush1.bf16.msra.mxu0 0
  %866 = vmatprep.subr.bf16.mxu0 0
  %867 = vmatpush1.bf16.msra.mxu0 0
  %868 = vmatprep.subr.bf16.mxu0 0
  %869 = vmatpush1.bf16.msra.mxu0 0
  %870 = vmatprep.mubr.bf16.mxu0 0
  %871 = vmatmul.mubr.bf16.gmra.mrb[0].mxu0 %v770
  %v872 = vpop.f32.mrb[0].mxu0
  %v873 = vadd.f32 %v789, %v872
  %v874 = vpop.f32.mrb[0].mxu0
  %v875 = vpop.f32.mrb[0].mxu0
  %v876 = vadd.f32 %v789, %v875
  %v877 = vpop.f32.mrb[0].mxu0
  %878 = vmatprep.mubr.bf16.mxu0 0
  %879 = vmatmul.mubr.bf16.gmra.mrb[0].mxu0 %v771
  %v880 = vpop.f32.mrb[0].mxu0
  %v881 = vadd.f32 %v789, %v880
  %v882 = vpop.f32.mrb[0].mxu0
  %v883 = vpop.f32.mrb[0].mxu0
  %v884 = vadd.f32 %v789, %v883
  %v885 = vpop.f32.mrb[0].mxu0
  %886 = vmatprep.mubr.bf16.mxu0 0
  %887 = vmatmul.mubr.bf16.gmra.mrb[0].mxu0 %v772
  %v888 = vpop.f32.mrb[0].mxu0
  %v889 = vadd.f32 %v789, %v888
  %v890 = vpop.f32.mrb[0].mxu0
  %v891 = vpop.f32.mrb[0].mxu0
  %v892 = vadd.f32 %v789, %v891
  %v893 = vpop.f32.mrb[0].mxu0
  %894 = vmatprep.mubr.bf16.mxu0 0
  %895 = vmatmul.mubr.bf16.gmra.mrb[0].mxu0 %v773
  %v896 = vpop.f32.mrb[0].mxu0
  %v897 = vadd.f32 %v789, %v896
  %v898 = vpop.f32.mrb[0].mxu0
  %v899 = vpop.f32.mrb[0].mxu0
  %v900 = vadd.f32 %v789, %v899
  %v901 = vpop.f32.mrb[0].mxu0
  %902 = vmatprep.mubr.bf16.mxu0 0
  %903 = vmatmul.mubr.bf16.gmra.mrb[0].mxu0 %v774
  %v904 = vpop.f32.mrb[0].mxu0
  %v905 = vadd.f32 %v789, %v904
  %v906 = vpop.f32.mrb[0].mxu0
  %v907 = vpop.f32.mrb[0].mxu0
  %v908 = vadd.f32 %v789, %v907
  %v909 = vpop.f32.mrb[0].mxu0
  %910 = vmatprep.mubr.bf16.mxu0 0
  %911 = vmatmul.mubr.bf16.gmra.mrb[0].mxu0 %v775
  %v912 = vpop.f32.mrb[0].mxu0
  %v913 = vadd.f32 %v789, %v912
  %v914 = vpop.f32.mrb[0].mxu0
  %v915 = vpop.f32.mrb[0].mxu0
  %v916 = vadd.f32 %v789, %v915
  %v917 = vpop.f32.mrb[0].mxu0
  %918 = vmatprep.mubr.bf16.mxu0 0
  %919 = vmatmul.mubr.bf16.gmra.mrb[0].mxu0 %v776
  %v920 = vpop.f32.mrb[0].mxu0
  %v921 = vadd.f32 %v789, %v920
  %v922 = vpop.f32.mrb[0].mxu0
  %v923 = vpop.f32.mrb[0].mxu0
  %v924 = vadd.f32 %v789, %v923
  %v925 = vpop.f32.mrb[0].mxu0
  %926 = vmatprep.mubr.bf16.mxu0 0
  %927 = vmatmul.mubr.bf16.gmra.mrb[0].mxu0 %v777
  %v928 = vpop.f32.mrb[0].mxu0
  %v929 = vadd.f32 %v789, %v928
  %v930 = vpop.f32.mrb[0].mxu0
  %v931 = vpop.f32.mrb[0].mxu0
  %v932 = vadd.f32 %v789, %v931
  %v933 = vpop.f32.mrb[0].mxu0
  %934 = vmatprep.mubr.bf16.mxu0 0
  %935 = vmatmul.mubr.bf16.gmra.mrb[0].mxu0 %v778
  %v936 = vpop.f32.mrb[0].mxu0
  %v937 = vadd.f32 %v789, %v936
  %v938 = vpop.f32.mrb[0].mxu0
  %v939 = vpop.f32.mrb[0].mxu0
  %v940 = vadd.f32 %v789, %v939
  %v941 = vpop.f32.mrb[0].mxu0
  %942 = vmatprep.mubr.bf16.mxu0 0
  %943 = vmatmul.mubr.bf16.gmra.mrb[0].mxu0 %v779
  %v944 = vpop.f32.mrb[0].mxu0
  %v945 = vadd.f32 %v789, %v944
  %v946 = vpop.f32.mrb[0].mxu0
  %v947 = vpop.f32.mrb[0].mxu0
  %v948 = vadd.f32 %v789, %v947
  %v949 = vpop.f32.mrb[0].mxu0
  %950 = vmatprep.mubr.bf16.mxu0 0
  %951 = vmatmul.mubr.bf16.gmra.mrb[0].mxu0 %v780
  %v952 = vpop.f32.mrb[0].mxu0
  %v953 = vadd.f32 %v789, %v952
  %v954 = vpop.f32.mrb[0].mxu0
  %v955 = vpop.f32.mrb[0].mxu0
  %v956 = vadd.f32 %v789, %v955
  %v957 = vpop.f32.mrb[0].mxu0
  %958 = vmatprep.mubr.bf16.mxu0 0
  %959 = vmatmul.mubr.bf16.gmra.mrb[0].mxu0 %v781
  %v960 = vpop.f32.mrb[0].mxu0
  %v961 = vadd.f32 %v789, %v960
  %v962 = vpop.f32.mrb[0].mxu0
  %v963 = vpop.f32.mrb[0].mxu0
  %v964 = vadd.f32 %v789, %v963
  %v965 = vpop.f32.mrb[0].mxu0
  %966 = vmatprep.mubr.bf16.mxu0 0
  %967 = vmatmul.mubr.bf16.gmra.mrb[0].mxu0 %v782
  %v968 = vpop.f32.mrb[0].mxu0
  %v969 = vadd.f32 %v789, %v968
  %v970 = vpop.f32.mrb[0].mxu0
  %v971 = vpop.f32.mrb[0].mxu0
  %v972 = vadd.f32 %v789, %v971
  %v973 = vpop.f32.mrb[0].mxu0
  %974 = vmatprep.mubr.bf16.mxu0 0
  %975 = vmatmul.mubr.bf16.gmra.mrb[0].mxu0 %v783
  %v976 = vpop.f32.mrb[0].mxu0
  %v977 = vadd.f32 %v789, %v976
  %v978 = vpop.f32.mrb[0].mxu0
  %v979 = vpop.f32.mrb[0].mxu0
  %v980 = vadd.f32 %v789, %v979
  %v981 = vpop.f32.mrb[0].mxu0
  %982 = vmatprep.mubr.bf16.mxu0 0
  %983 = vmatmul.mubr.bf16.gmra.mrb[0].mxu0 %v784
  %v984 = vpop.f32.mrb[0].mxu0
  %v985 = vadd.f32 %v789, %v984
  %v986 = vpop.f32.mrb[0].mxu0
  %v987 = vpop.f32.mrb[0].mxu0
  %v988 = vadd.f32 %v789, %v987
  %v989 = vpop.f32.mrb[0].mxu0
  %990 = vmatprep.mubr.bf16.mxu0 0
  %991 = vmatmul.mubr.bf16.gmra.mrb[0].mxu0 %v785
  %v992 = vpop.f32.mrb[0].mxu0
  %v993 = vadd.f32 %v789, %v992
  %v994 = vpop.f32.mrb[0].mxu0
  %v995 = vpop.f32.mrb[0].mxu0
  %v996 = vadd.f32 %v789, %v995
  %v997 = vpop.f32.mrb[0].mxu0
  %998 = vdwg.mxu0
  %v999 = vtanh.pop %v873
  %v1000 = vtanh.pop %v876
  %v1001 = vtanh.pop %v881
  %v1002 = vtanh.pop %v884
  %v1003 = vtanh.pop %v889
  %v1004 = vtanh.pop %v892
  %v1005 = vtanh.pop %v897
  %v1006 = vtanh.pop %v900
  %v1007 = vtanh.pop %v905
  %v1008 = vtanh.pop %v908
  %v1009 = vtanh.pop %v913
  %v1010 = vtanh.pop %v916
  %v1011 = vtanh.pop %v921
  %v1012 = vtanh.pop %v924
  %v1013 = vtanh.pop %v929
  %v1014 = vtanh.pop %v932
  %v1015 = vtanh.pop %v937
  %v1016 = vtanh.pop %v940
  %v1017 = vtanh.pop %v945
  %v1018 = vtanh.pop %v948
  %v1019 = vtanh.pop %v953
  %v1020 = vtanh.pop %v956
  %v1021 = vtanh.pop %v961
  %v1022 = vtanh.pop %v964
  %v1023 = vtanh.pop %v969
  %v1024 = vtanh.pop %v972
  %v1025 = vtanh.pop %v977
  %v1026 = vtanh.pop %v980
  %v1027 = vtanh.pop %v985
  %v1028 = vtanh.pop %v988
  %v1029 = vtanh.pop %v993
  %v1030 = vtanh.pop %v996
  %v1031 = vlaneseq
  %v1032 = vshrl.u32 %v1031, 7
  %v1033 = vsub.s32 5, %v1032
  %v1034 = vrot.slane %v47, %v1033
  %v1035 = vmul.f32 %v999, %v1034
  %v1036 = vmul.f32 %v1000, %v1034
  %v1037 = vmul.f32 %v1001, %v1034
  %v1038 = vmul.f32 %v1002, %v1034
  %v1039 = vmul.f32 %v1003, %v1034
  %v1040 = vmul.f32 %v1004, %v1034
  %v1041 = vmul.f32 %v1005, %v1034
  %v1042 = vmul.f32 %v1006, %v1034
  %v1043 = vmul.f32 %v1007, %v1034
  %v1044 = vmul.f32 %v1008, %v1034
  %v1045 = vmul.f32 %v1009, %v1034
  %v1046 = vmul.f32 %v1010, %v1034
  %v1047 = vmul.f32 %v1011, %v1034
  %v1048 = vmul.f32 %v1012, %v1034
  %v1049 = vmul.f32 %v1013, %v1034
  %v1050 = vmul.f32 %v1014, %v1034
  %v1051 = vmul.f32 %v1015, %v1034
  %v1052 = vmul.f32 %v1016, %v1034
  %v1053 = vmul.f32 %v1017, %v1034
  %v1054 = vmul.f32 %v1018, %v1034
  %v1055 = vmul.f32 %v1019, %v1034
  %v1056 = vmul.f32 %v1020, %v1034
  %v1057 = vmul.f32 %v1021, %v1034
  %v1058 = vmul.f32 %v1022, %v1034
  %v1059 = vmul.f32 %v1023, %v1034
  %v1060 = vmul.f32 %v1024, %v1034
  %v1061 = vmul.f32 %v1025, %v1034
  %v1062 = vmul.f32 %v1026, %v1034
  %v1063 = vmul.f32 %v1027, %v1034
  %v1064 = vmul.f32 %v1028, %v1034
  %v1065 = vmul.f32 %v1029, %v1034
  %v1066 = vmul.f32 %v1030, %v1034
  %1067 = vadd.xlane.f32.xlu0 %v1035
  %v1068 = vpop.xlane.xlu0 %1067
  %1069 = vadd.xlane.f32.xlu0 %v1036
  %v1070 = vpop.xlane.xlu0 %1069
  %1071 = vadd.xlane.f32.xlu0 %v1037
  %v1072 = vpop.xlane.xlu0 %1071
  %1073 = vadd.xlane.f32.xlu0 %v1038
  %v1074 = vpop.xlane.xlu0 %1073
  %1075 = vadd.xlane.f32.xlu0 %v1039
  %v1076 = vpop.xlane.xlu0 %1075
  %1077 = vadd.xlane.f32.xlu0 %v1040
  %v1078 = vpop.xlane.xlu0 %1077
  %1079 = vadd.xlane.f32.xlu0 %v1041
  %v1080 = vpop.xlane.xlu0 %1079
  %1081 = vadd.xlane.f32.xlu0 %v1042
  %v1082 = vpop.xlane.xlu0 %1081
  %1083 = vadd.xlane.f32.xlu0 %v1043
  %v1084 = vpop.xlane.xlu0 %1083
  %1085 = vadd.xlane.f32.xlu0 %v1044
  %v1086 = vpop.xlane.xlu0 %1085
  %1087 = vadd.xlane.f32.xlu0 %v1045
  %v1088 = vpop.xlane.xlu0 %1087
  %1089 = vadd.xlane.f32.xlu0 %v1046
  %v1090 = vpop.xlane.xlu0 %1089
  %1091 = vadd.xlane.f32.xlu0 %v1047
  %v1092 = vpop.xlane.xlu0 %1091
  %1093 = vadd.xlane.f32.xlu0 %v1048
  %v1094 = vpop.xlane.xlu0 %1093
  %1095 = vadd.xlane.f32.xlu0 %v1049
  %v1096 = vpop.xlane.xlu0 %1095
  %1097 = vadd.xlane.f32.xlu0 %v1050
  %v1098 = vpop.xlane.xlu0 %1097
  %1099 = vadd.xlane.f32.xlu0 %v1051
  %v1100 = vpop.xlane.xlu0 %1099
  %1101 = vadd.xlane.f32.xlu0 %v1052
  %v1102 = vpop.xlane.xlu0 %1101
  %1103 = vadd.xlane.f32.xlu0 %v1053
  %v1104 = vpop.xlane.xlu0 %1103
  %1105 = vadd.xlane.f32.xlu0 %v1054
  %v1106 = vpop.xlane.xlu0 %1105
  %1107 = vadd.xlane.f32.xlu0 %v1055
  %v1108 = vpop.xlane.xlu0 %1107
  %1109 = vadd.xlane.f32.xlu0 %v1056
  %v1110 = vpop.xlane.xlu0 %1109
  %1111 = vadd.xlane.f32.xlu0 %v1057
  %v1112 = vpop.xlane.xlu0 %1111
  %1113 = vadd.xlane.f32.xlu0 %v1058
  %v1114 = vpop.xlane.xlu0 %1113
  %1115 = vadd.xlane.f32.xlu0 %v1059
  %v1116 = vpop.xlane.xlu0 %1115
  %1117 = vadd.xlane.f32.xlu0 %v1060
  %v1118 = vpop.xlane.xlu0 %1117
  %1119 = vadd.xlane.f32.xlu0 %v1061
  %v1120 = vpop.xlane.xlu0 %1119
  %1121 = vadd.xlane.f32.xlu0 %v1062
  %v1122 = vpop.xlane.xlu0 %1121
  %1123 = vadd.xlane.f32.xlu0 %v1063
  %v1124 = vpop.xlane.xlu0 %1123
  %1125 = vadd.xlane.f32.xlu0 %v1064
  %v1126 = vpop.xlane.xlu0 %1125
  %1127 = vadd.xlane.f32.xlu0 %v1065
  %v1128 = vpop.xlane.xlu0 %1127
  %1129 = vadd.xlane.f32.xlu0 %v1066
  %v1130 = vpop.xlane.xlu0 %1129
  %v1131 = vlaneseq
  %v1132 = vshrl.u32 %v1131, 7
  %v1133 = vsub.s32 6, %v1132
  %v1134 = vrot.slane %v47, %v1133
  %v1135 = vmul.f32 %v1068, %v1134
  %v1136 = vmul.f32 %v1070, %v1134
  %v1137 = vmul.f32 %v1072, %v1134
  %v1138 = vmul.f32 %v1074, %v1134
  %v1139 = vmul.f32 %v1076, %v1134
  %v1140 = vmul.f32 %v1078, %v1134
  %v1141 = vmul.f32 %v1080, %v1134
  %v1142 = vmul.f32 %v1082, %v1134
  %v1143 = vmul.f32 %v1084, %v1134
  %v1144 = vmul.f32 %v1086, %v1134
  %v1145 = vmul.f32 %v1088, %v1134
  %v1146 = vmul.f32 %v1090, %v1134
  %v1147 = vmul.f32 %v1092, %v1134
  %v1148 = vmul.f32 %v1094, %v1134
  %v1149 = vmul.f32 %v1096, %v1134
  %v1150 = vmul.f32 %v1098, %v1134
  %v1151 = vmul.f32 %v1100, %v1134
  %v1152 = vmul.f32 %v1102, %v1134
  %v1153 = vmul.f32 %v1104, %v1134
  %v1154 = vmul.f32 %v1106, %v1134
  %v1155 = vmul.f32 %v1108, %v1134
  %v1156 = vmul.f32 %v1110, %v1134
  %v1157 = vmul.f32 %v1112, %v1134
  %v1158 = vmul.f32 %v1114, %v1134
  %v1159 = vmul.f32 %v1116, %v1134
  %v1160 = vmul.f32 %v1118, %v1134
  %v1161 = vmul.f32 %v1120, %v1134
  %v1162 = vmul.f32 %v1122, %v1134
  %v1163 = vmul.f32 %v1124, %v1134
  %v1164 = vmul.f32 %v1126, %v1134
  %v1165 = vmul.f32 %v1128, %v1134
  %v1166 = vmul.f32 %v1130, %v1134
  %v1167 = vlaneseq
  %v1168 = vshrl.u32 %v1167, 7
  %v1169 = vsub.s32 7, %v1168
  %v1170 = vrot.slane %v47, %v1169
  %v1171 = vadd.f32 %v1135, %v1170
  %v1172 = vadd.f32 %v1136, %v1170
  %v1173 = vadd.f32 %v1137, %v1170
  %v1174 = vadd.f32 %v1138, %v1170
  %v1175 = vadd.f32 %v1139, %v1170
  %v1176 = vadd.f32 %v1140, %v1170
  %v1177 = vadd.f32 %v1141, %v1170
  %v1178 = vadd.f32 %v1142, %v1170
  %v1179 = vadd.f32 %v1143, %v1170
  %v1180 = vadd.f32 %v1144, %v1170
  %v1181 = vadd.f32 %v1145, %v1170
  %v1182 = vadd.f32 %v1146, %v1170
  %v1183 = vadd.f32 %v1147, %v1170
  %v1184 = vadd.f32 %v1148, %v1170
  %v1185 = vadd.f32 %v1149, %v1170
  %v1186 = vadd.f32 %v1150, %v1170
  %v1187 = vadd.f32 %v1151, %v1170
  %v1188 = vadd.f32 %v1152, %v1170
  %v1189 = vadd.f32 %v1153, %v1170
  %v1190 = vadd.f32 %v1154, %v1170
  %v1191 = vadd.f32 %v1155, %v1170
  %v1192 = vadd.f32 %v1156, %v1170
  %v1193 = vadd.f32 %v1157, %v1170
  %v1194 = vadd.f32 %v1158, %v1170
  %v1195 = vadd.f32 %v1159, %v1170
  %v1196 = vadd.f32 %v1160, %v1170
  %v1197 = vadd.f32 %v1161, %v1170
  %v1198 = vadd.f32 %v1162, %v1170
  %v1199 = vadd.f32 %v1163, %v1170
  %v1200 = vadd.f32 %v1164, %v1170
  %v1201 = vadd.f32 %v1165, %v1170
  %v1202 = vadd.f32 %v1166, %v1170
  %1203 = vset.pattern.permute.xlu0 2
  %1204 = vperm.xlu0 %1203, %v15
  %v1205 = vpop.permute.xlu0 %1204
  %1207 = vset.pattern.permute.xlu0 2
  %1208 = vperm.xlu0 %1207, %v16
  %v1209 = vpop.permute.xlu0 %1208
  %1211 = vset.pattern.permute.xlu0 2
  %1212 = vperm.xlu0 %1211, %v17
  %v1213 = vpop.permute.xlu0 %1212
  %1215 = vset.pattern.permute.xlu0 2
  %1216 = vperm.xlu0 %1215, %v18
  %v1217 = vpop.permute.xlu0 %1216
  %1219 = vset.pattern.permute.xlu0 2
  %1220 = vperm.xlu0 %1219, %v19
  %v1221 = vpop.permute.xlu0 %1220
  %1223 = vset.pattern.permute.xlu0 2
  %1224 = vperm.xlu0 %1223, %v20
  %v1225 = vpop.permute.xlu0 %1224
  %1227 = vset.pattern.permute.xlu0 2
  %1228 = vperm.xlu0 %1227, %v21
  %v1229 = vpop.permute.xlu0 %1228
  %1231 = vset.pattern.permute.xlu0 2
  %1232 = vperm.xlu0 %1231, %v22
  %v1233 = vpop.permute.xlu0 %1232
  %1235 = vset.pattern.permute.xlu0 2
  %1236 = vperm.xlu0 %1235, %v23
  %v1237 = vpop.permute.xlu0 %1236
  %1239 = vset.pattern.permute.xlu0 2
  %1240 = vperm.xlu0 %1239, %v24
  %v1241 = vpop.permute.xlu0 %1240
  %1243 = vset.pattern.permute.xlu0 2
  %1244 = vperm.xlu0 %1243, %v25
  %v1245 = vpop.permute.xlu0 %1244
  %1247 = vset.pattern.permute.xlu0 2
  %1248 = vperm.xlu0 %1247, %v26
  %v1249 = vpop.permute.xlu0 %1248
  %1251 = vset.pattern.permute.xlu0 2
  %1252 = vperm.xlu0 %1251, %v27
  %v1253 = vpop.permute.xlu0 %1252
  %1255 = vset.pattern.permute.xlu0 2
  %1256 = vperm.xlu0 %1255, %v28
  %v1257 = vpop.permute.xlu0 %1256
  %1259 = vset.pattern.permute.xlu0 2
  %1260 = vperm.xlu0 %1259, %v29
  %v1261 = vpop.permute.xlu0 %1260
  %1263 = vset.pattern.permute.xlu0 2
  %1264 = vperm.xlu0 %1263, %v30
  %v1265 = vpop.permute.xlu0 %1264
  %1267 = vset.pattern.permute.xlu0 2
  %1268 = vperm.xlu0 %1267, %v31
  %v1269 = vpop.permute.xlu0 %1268
  %1271 = vset.pattern.permute.xlu0 2
  %1272 = vperm.xlu0 %1271, %v32
  %v1273 = vpop.permute.xlu0 %1272
  %1275 = vset.pattern.permute.xlu0 2
  %1276 = vperm.xlu0 %1275, %v33
  %v1277 = vpop.permute.xlu0 %1276
  %1279 = vset.pattern.permute.xlu0 2
  %1280 = vperm.xlu0 %1279, %v34
  %v1281 = vpop.permute.xlu0 %1280
  %1283 = vset.pattern.permute.xlu0 2
  %1284 = vperm.xlu0 %1283, %v35
  %v1285 = vpop.permute.xlu0 %1284
  %1287 = vset.pattern.permute.xlu0 2
  %1288 = vperm.xlu0 %1287, %v36
  %v1289 = vpop.permute.xlu0 %1288
  %1291 = vset.pattern.permute.xlu0 2
  %1292 = vperm.xlu0 %1291, %v37
  %v1293 = vpop.permute.xlu0 %1292
  %1295 = vset.pattern.permute.xlu0 2
  %1296 = vperm.xlu0 %1295, %v38
  %v1297 = vpop.permute.xlu0 %1296
  %1299 = vset.pattern.permute.xlu0 2
  %1300 = vperm.xlu0 %1299, %v39
  %v1301 = vpop.permute.xlu0 %1300
  %1303 = vset.pattern.permute.xlu0 2
  %1304 = vperm.xlu0 %1303, %v40
  %v1305 = vpop.permute.xlu0 %1304
  %1307 = vset.pattern.permute.xlu0 2
  %1308 = vperm.xlu0 %1307, %v41
  %v1309 = vpop.permute.xlu0 %1308
  %1311 = vset.pattern.permute.xlu0 2
  %1312 = vperm.xlu0 %1311, %v42
  %v1313 = vpop.permute.xlu0 %1312
  %1315 = vset.pattern.permute.xlu0 2
  %1316 = vperm.xlu0 %1315, %v43
  %v1317 = vpop.permute.xlu0 %1316
  %1319 = vset.pattern.permute.xlu0 2
  %1320 = vperm.xlu0 %1319, %v44
  %v1321 = vpop.permute.xlu0 %1320
  %1323 = vset.pattern.permute.xlu0 2
  %1324 = vperm.xlu0 %1323, %v45
  %v1325 = vpop.permute.xlu0 %1324
  %1327 = vset.pattern.permute.xlu0 2
  %1328 = vperm.xlu0 %1327, %v46
  %v1329 = vpop.permute.xlu0 %1328
  %v1331 = vmul.f32 %v1171, %v1205
  %v1332 = vmul.f32 %v1172, %v1209
  %v1333 = vmul.f32 %v1173, %v1213
  %v1334 = vmul.f32 %v1174, %v1217
  %v1335 = vmul.f32 %v1175, %v1221
  %v1336 = vmul.f32 %v1176, %v1225
  %v1337 = vmul.f32 %v1177, %v1229
  %v1338 = vmul.f32 %v1178, %v1233
  %v1339 = vmul.f32 %v1179, %v1237
  %v1340 = vmul.f32 %v1180, %v1241
  %v1341 = vmul.f32 %v1181, %v1245
  %v1342 = vmul.f32 %v1182, %v1249
  %v1343 = vmul.f32 %v1183, %v1253
  %v1344 = vmul.f32 %v1184, %v1257
  %v1345 = vmul.f32 %v1185, %v1261
  %v1346 = vmul.f32 %v1186, %v1265
  %v1347 = vmul.f32 %v1187, %v1269
  %v1348 = vmul.f32 %v1188, %v1273
  %v1349 = vmul.f32 %v1189, %v1277
  %v1350 = vmul.f32 %v1190, %v1281
  %v1351 = vmul.f32 %v1191, %v1285
  %v1352 = vmul.f32 %v1192, %v1289
  %v1353 = vmul.f32 %v1193, %v1293
  %v1354 = vmul.f32 %v1194, %v1297
  %v1355 = vmul.f32 %v1195, %v1301
  %v1356 = vmul.f32 %v1196, %v1305
  %v1357 = vmul.f32 %v1197, %v1309
  %v1358 = vmul.f32 %v1198, %v1313
  %v1359 = vmul.f32 %v1199, %v1317
  %v1360 = vmul.f32 %v1200, %v1321
  %v1361 = vmul.f32 %v1201, %v1325
  %v1362 = vmul.f32 %v1202, %v1329
  %1363 = vset.pattern.permute.xlu0 3
  %1364 = vperm.xlu0 %1363, %v15
  %v1365 = vpop.permute.xlu0 %1364
  %1367 = vset.pattern.permute.xlu0 3
  %1368 = vperm.xlu0 %1367, %v16
  %v1369 = vpop.permute.xlu0 %1368
  %1371 = vset.pattern.permute.xlu0 3
  %1372 = vperm.xlu0 %1371, %v17
  %v1373 = vpop.permute.xlu0 %1372
  %1375 = vset.pattern.permute.xlu0 3
  %1376 = vperm.xlu0 %1375, %v18
  %v1377 = vpop.permute.xlu0 %1376
  %1379 = vset.pattern.permute.xlu0 3
  %1380 = vperm.xlu0 %1379, %v19
  %v1381 = vpop.permute.xlu0 %1380
  %1383 = vset.pattern.permute.xlu0 3
  %1384 = vperm.xlu0 %1383, %v20
  %v1385 = vpop.permute.xlu0 %1384
  %1387 = vset.pattern.permute.xlu0 3
  %1388 = vperm.xlu0 %1387, %v21
  %v1389 = vpop.permute.xlu0 %1388
  %1391 = vset.pattern.permute.xlu0 3
  %1392 = vperm.xlu0 %1391, %v22
  %v1393 = vpop.permute.xlu0 %1392
  %1395 = vset.pattern.permute.xlu0 3
  %1396 = vperm.xlu0 %1395, %v23
  %v1397 = vpop.permute.xlu0 %1396
  %1399 = vset.pattern.permute.xlu0 3
  %1400 = vperm.xlu0 %1399, %v24
  %v1401 = vpop.permute.xlu0 %1400
  %1403 = vset.pattern.permute.xlu0 3
  %1404 = vperm.xlu0 %1403, %v25
  %v1405 = vpop.permute.xlu0 %1404
  %1407 = vset.pattern.permute.xlu0 3
  %1408 = vperm.xlu0 %1407, %v26
  %v1409 = vpop.permute.xlu0 %1408
  %1411 = vset.pattern.permute.xlu0 3
  %1412 = vperm.xlu0 %1411, %v27
  %v1413 = vpop.permute.xlu0 %1412
  %1415 = vset.pattern.permute.xlu0 3
  %1416 = vperm.xlu0 %1415, %v28
  %v1417 = vpop.permute.xlu0 %1416
  %1419 = vset.pattern.permute.xlu0 3
  %1420 = vperm.xlu0 %1419, %v29
  %v1421 = vpop.permute.xlu0 %1420
  %1423 = vset.pattern.permute.xlu0 3
  %1424 = vperm.xlu0 %1423, %v30
  %v1425 = vpop.permute.xlu0 %1424
  %1427 = vset.pattern.permute.xlu0 3
  %1428 = vperm.xlu0 %1427, %v31
  %v1429 = vpop.permute.xlu0 %1428
  %1431 = vset.pattern.permute.xlu0 3
  %1432 = vperm.xlu0 %1431, %v32
  %v1433 = vpop.permute.xlu0 %1432
  %1435 = vset.pattern.permute.xlu0 3
  %1436 = vperm.xlu0 %1435, %v33
  %v1437 = vpop.permute.xlu0 %1436
  %1439 = vset.pattern.permute.xlu0 3
  %1440 = vperm.xlu0 %1439, %v34
  %v1441 = vpop.permute.xlu0 %1440
  %1443 = vset.pattern.permute.xlu0 3
  %1444 = vperm.xlu0 %1443, %v35
  %v1445 = vpop.permute.xlu0 %1444
  %1447 = vset.pattern.permute.xlu0 3
  %1448 = vperm.xlu0 %1447, %v36
  %v1449 = vpop.permute.xlu0 %1448
  %1451 = vset.pattern.permute.xlu0 3
  %1452 = vperm.xlu0 %1451, %v37
  %v1453 = vpop.permute.xlu0 %1452
  %1455 = vset.pattern.permute.xlu0 3
  %1456 = vperm.xlu0 %1455, %v38
  %v1457 = vpop.permute.xlu0 %1456
  %1459 = vset.pattern.permute.xlu0 3
  %1460 = vperm.xlu0 %1459, %v39
  %v1461 = vpop.permute.xlu0 %1460
  %1463 = vset.pattern.permute.xlu0 3
  %1464 = vperm.xlu0 %1463, %v40
  %v1465 = vpop.permute.xlu0 %1464
  %1467 = vset.pattern.permute.xlu0 3
  %1468 = vperm.xlu0 %1467, %v41
  %v1469 = vpop.permute.xlu0 %1468
  %1471 = vset.pattern.permute.xlu0 3
  %1472 = vperm.xlu0 %1471, %v42
  %v1473 = vpop.permute.xlu0 %1472
  %1475 = vset.pattern.permute.xlu0 3
  %1476 = vperm.xlu0 %1475, %v43
  %v1477 = vpop.permute.xlu0 %1476
  %1479 = vset.pattern.permute.xlu0 3
  %1480 = vperm.xlu0 %1479, %v44
  %v1481 = vpop.permute.xlu0 %1480
  %1483 = vset.pattern.permute.xlu0 3
  %1484 = vperm.xlu0 %1483, %v45
  %v1485 = vpop.permute.xlu0 %1484
  %1487 = vset.pattern.permute.xlu0 3
  %1488 = vperm.xlu0 %1487, %v46
  %v1489 = vpop.permute.xlu0 %1488
  %v1491 = vadd.f32 %v1331, %v1365
  %v1492 = vadd.f32 %v1332, %v1369
  %v1493 = vadd.f32 %v1333, %v1373
  %v1494 = vadd.f32 %v1334, %v1377
  %v1495 = vadd.f32 %v1335, %v1381
  %v1496 = vadd.f32 %v1336, %v1385
  %v1497 = vadd.f32 %v1337, %v1389
  %v1498 = vadd.f32 %v1338, %v1393
  %v1499 = vadd.f32 %v1339, %v1397
  %v1500 = vadd.f32 %v1340, %v1401
  %v1501 = vadd.f32 %v1341, %v1405
  %v1502 = vadd.f32 %v1342, %v1409
  %v1503 = vadd.f32 %v1343, %v1413
  %v1504 = vadd.f32 %v1344, %v1417
  %v1505 = vadd.f32 %v1345, %v1421
  %v1506 = vadd.f32 %v1346, %v1425
  %v1507 = vadd.f32 %v1347, %v1429
  %v1508 = vadd.f32 %v1348, %v1433
  %v1509 = vadd.f32 %v1349, %v1437
  %v1510 = vadd.f32 %v1350, %v1441
  %v1511 = vadd.f32 %v1351, %v1445
  %v1512 = vadd.f32 %v1352, %v1449
  %v1513 = vadd.f32 %v1353, %v1453
  %v1514 = vadd.f32 %v1354, %v1457
  %v1515 = vadd.f32 %v1355, %v1461
  %v1516 = vadd.f32 %v1356, %v1465
  %v1517 = vadd.f32 %v1357, %v1469
  %v1518 = vadd.f32 %v1358, %v1473
  %v1519 = vadd.f32 %v1359, %v1477
  %v1520 = vadd.f32 %v1360, %v1481
  %v1521 = vadd.f32 %v1361, %v1485
  %v1522 = vadd.f32 %v1362, %v1489
  %1523 = vst [vmem:[%s3] sm:$0xff] %v1491
  %1524 = vst [vmem:[%s3 + $0x8] sm:$0xff] %v1492
  %1525 = vst [vmem:[%s3 + $0x10] sm:$0xff] %v1493
  %1526 = vst [vmem:[%s3 + $0x18] sm:$0xff] %v1494
  %1527 = vst [vmem:[%s3 + $0x20] sm:$0xff] %v1495
  %1528 = vst [vmem:[%s3 + $0x28] sm:$0xff] %v1496
  %1529 = vst [vmem:[%s3 + $0x30] sm:$0xff] %v1497
  %1530 = vst [vmem:[%s3 + $0x38] sm:$0xff] %v1498
  %1531 = vst [vmem:[%s3 + $0x40] sm:$0xff] %v1499
  %1532 = vst [vmem:[%s3 + $0x48] sm:$0xff] %v1500
  %1533 = vst [vmem:[%s3 + $0x50] sm:$0xff] %v1501
  %1534 = vst [vmem:[%s3 + $0x58] sm:$0xff] %v1502
  %1535 = vst [vmem:[%s3 + $0x60] sm:$0xff] %v1503
  %1536 = vst [vmem:[%s3 + $0x68] sm:$0xff] %v1504
  %1537 = vst [vmem:[%s3 + $0x70] sm:$0xff] %v1505
  %1538 = vst [vmem:[%s3 + $0x78] sm:$0xff] %v1506
  %1539 = vst [vmem:[%s3 + $0x80] sm:$0xff] %v1507
  %1540 = vst [vmem:[%s3 + $0x88] sm:$0xff] %v1508
  %1541 = vst [vmem:[%s3 + $0x90] sm:$0xff] %v1509
  %1542 = vst [vmem:[%s3 + $0x98] sm:$0xff] %v1510
  %1543 = vst [vmem:[%s3 + $0xa0] sm:$0xff] %v1511
  %1544 = vst [vmem:[%s3 + $0xa8] sm:$0xff] %v1512
  %1545 = vst [vmem:[%s3 + $0xb0] sm:$0xff] %v1513
  %1546 = vst [vmem:[%s3 + $0xb8] sm:$0xff] %v1514
  %1547 = vst [vmem:[%s3 + $0xc0] sm:$0xff] %v1515
  %1548 = vst [vmem:[%s3 + $0xc8] sm:$0xff] %v1516
  %1549 = vst [vmem:[%s3 + $0xd0] sm:$0xff] %v1517
  %1550 = vst [vmem:[%s3 + $0xd8] sm:$0xff] %v1518
  %1551 = vst [vmem:[%s3 + $0xe0] sm:$0xff] %v1519
  %1552 = vst [vmem:[%s3 + $0xe8] sm:$0xff] %v1520
  %1553 = vst [vmem:[%s3 + $0xf0] sm:$0xff] %v1521
  %1554 = vst [vmem:[%s3 + $0xf8] sm:$0xff] %v1522
  // Predicated region
  $region14: #{deeponet_pallas.1} parent=0 // pred_check
    _
  $region15: #{deeponet_pallas.1} parent=0 // pred_check_branch
    %1556 = sbr.rel (0) target = $region17
  $region16: #{deeponet_pallas.1} parent=0 // pred_region
    _
  $region17: #{deeponet_pallas.1} parent=0 // pred_fallthru
    _
  // Predicated region
  $region18: #{deeponet_pallas.1} parent=0 // pred_check
    _
  $region19: #{deeponet_pallas.1} parent=0 // pred_check_branch
    %1558 = sbr.rel (0) target = $region21
  $region20: #{deeponet_pallas.1} parent=0 // pred_region
    _
  $region21: #{deeponet_pallas.1} parent=0 // pred_fallthru
    _

</llo_original>
